<compile_context>
chip_gen: v5e
topology: v5e:2x2
jax: 0.10.0
libtpu: 0.0.40
codegen_flags: <defaults>
</compile_context>

<pallas_src>
import math

import jax
import jax.numpy as jnp
import numpy as np
from jax import lax
from jax.experimental import pallas as pl
from jax.experimental.pallas import tpu as pltpu


def _make_attn_kernel(heads_per_block, head_size, gsz, has_mask, output_scores,
                      compute_dtype, out_dtype):
    inv_sqrt_d = 1.0 / math.sqrt(head_size)

    def kernel(*refs):
        n_in = 4 if has_mask else 3
        hs_ref, wqkv_ref, bqkv_ref = refs[0], refs[1], refs[2]
        mask_ref = refs[3] if has_mask else None
        out_refs = refs[n_in:]
        if output_scores:
            ctx_ref, scores_ref = out_refs
        else:
            (ctx_ref,) = out_refs

        hb = pl.program_id(1)                       # head-block index (grid-resident weights)

        hs = hs_ref[0]                              # (S, H) in compute_dtype
        # Single fused QKV projection for all heads in the block:
        # (S, H) @ (H, 3*gsz) with f32 accumulation, then one cast for the whole block.
        qkv = jnp.dot(hs, wqkv_ref[hb], preferred_element_type=jnp.float32) + bqkv_ref[hb]
        qkv_c = qkv.astype(compute_dtype)

        mask = mask_ref[0].astype(jnp.float32) if has_mask else None   # (S,S) or (1,S)

        hd = head_size
        ctx_cols = []
        for h in range(heads_per_block):            # small (2-4), fully unrolled
            qh = qkv_c[:, h * hd:(h + 1) * hd]
            kh = qkv_c[:, gsz + h * hd:gsz + (h + 1) * hd]
            vh = qkv_c[:, 2 * gsz + h * hd:2 * gsz + (h + 1) * hd]
            # Q @ K^T without materializing K^T: contract the head dims directly.
            scores = lax.dot_general(qh, kh, (((1,), (1,)), ((), ())),
                                     preferred_element_type=jnp.float32)   # (S, S)
            if has_mask:
                scores = scores + mask
            if output_scores:
                # Module returns scores post-mask, pre-scale (pre-softmax).
                scores_ref[0, h] = scores
                scores = scores * inv_sqrt_d
            # else: 1/sqrt(head_size) is already folded into Wq/bq (and the mask) by the
            # wrapper, so no per-head (S,S) scale multiply is needed here.
            scores = scores - jnp.max(scores, axis=-1, keepdims=True)
            e = jnp.exp(scores)
            # TODO(synk): attention-probs dropout omitted (inference / eval-mode identity).
            probs = e * pl.reciprocal(jnp.sum(e, axis=-1, keepdims=True), approx=True)
            ctx_cols.append(jnp.dot(probs.astype(compute_dtype), vh,
                                    preferred_element_type=jnp.float32))
        # Single lane-dense (S, gsz) store directly in the final (B, S, H) layout.
        ctx_ref[0] = jnp.concatenate(ctx_cols, axis=-1).astype(out_dtype)

    return kernel


def _tpu_generation_params():
    """(mxu_lane_target, vmem_cap_bytes_or_None) for the local TPU generation."""
    try:
        kind = jax.devices()[0].device_kind.lower()
    except Exception:
        kind = ""
    if "v7" in kind or "tpu7" in kind:
        return 256, 48 << 20          # v7x: 64 MiB physical VMEM -> keep headroom
    if "v6" in kind or "tpu6" in kind:
        return 256, 96 << 20          # v6e: 2x256x256 MXU, 128 MiB VMEM
    if "v5" in kind or "v4" in kind:
        return 128, 96 << 20          # v5e/v5p/v4: 128-wide MXU target
    return 128, None                  # unknown: conservative, leave VMEM limit at default


def custom_bert_self_attention(hidden_states, wq, bq, wk, bk, wv, bv,
                               attention_mask=None, *, num_heads,
                               output_attentions=False, heads_per_block=None,
                               compute_dtype=None):
    """
    hidden_states: (B, S, H)
    wq/wk/wv:      (H, H) PyTorch nn.Linear weights (out_features, in_features)
    bq/bk/bv:      (H,)
    attention_mask: None, (B, S, S), (B, 1, S), (B, 1, 1, S) or (B, 1, S, S) additive mask
    Returns (result,) or (result, attention_scores), matching the PyTorch module.
    """
    B, S, H = hidden_states.shape
    if H % num_heads:
        raise ValueError("Hidden size not divisible by number of attention heads")
    head_size = H // num_heads
    out_dtype = hidden_states.dtype
    if compute_dtype is None:
        # bf16 MXU operands by default (f32 accumulation + f32 softmax are kept).
        # Pass compute_dtype=jnp.float32 for bit-tighter results / score matching.
        compute_dtype = jnp.bfloat16

    lane_target, vmem_cap = _tpu_generation_params()

    if heads_per_block is None:
        # Smallest head group whose fused width reaches the MXU output width.
        heads_per_block = num_heads
        for cand in range(1, num_heads + 1):
            if num_heads % cand == 0 and cand * head_size >= lane_target:
                heads_per_block = cand
                break
    if num_heads % heads_per_block:
        raise ValueError("num_heads must be divisible by heads_per_block")
    nhb = num_heads // heads_per_block
    gsz = heads_per_block * head_size

    # Fold 1/sqrt(head_size) into Wq/bq (and the mask) when we don't have to return
    # unscaled scores: softmax((q*s)@k^T + m*s) == softmax(s*(q@k^T + m)).
    fold_scale = not output_attentions
    inv_sqrt_d = 1.0 / math.sqrt(head_size)
    q_scale = inv_sqrt_d if fold_scale else 1.0

    # PyTorch Linear: y = x @ W^T + b.  W is (H_out, H_in); transpose to (H, H_out), group
    # `heads_per_block` consecutive heads per block, and fuse Q/K/V along the last axis.
    def blockify_w(w, scale=1.0):
        wt = jnp.transpose(w, (1, 0)) * scale
        return wt.reshape(H, nhb, gsz).transpose(1, 0, 2)      # (nhb, H, gsz)

    def blockify_b(b, scale=1.0):
        return (b * scale).reshape(nhb, 1, gsz)                # (nhb, 1, gsz)

    wqkv = jnp.concatenate(
        [blockify_w(wq, q_scale), blockify_w(wk), blockify_w(wv)],
        axis=-1).astype(compute_dtype)                         # (nhb, H, 3*gsz)
    bqkv = jnp.concatenate(
        [blockify_b(bq, q_scale), blockify_b(bk), blockify_b(bv)],
        axis=-1).astype(jnp.float32)                           # (nhb, 1, 3*gsz)
    hs_c = hidden_states.astype(compute_dtype)

    # Normalize the additive mask; never materialize a dense zero mask.
    has_mask = attention_mask is not None
    mask_args = ()
    Sm = 1
    if has_mask:
        m = attention_mask.astype(jnp.float32)
        if m.ndim == 4:                      # BERT-style (B,1,1,S) or (B,1,S,S)
            m = m[:, 0]
        if m.ndim != 3 or m.shape[0] != B or m.shape[-1] != S or m.shape[1] not in (1, S):
            raise ValueError(f"Unsupported attention_mask shape {attention_mask.shape}")
        Sm = m.shape[1]                      # 1 (key mask, broadcast in-kernel) or S (full)
        if fold_scale:
            m = m * inv_sqrt_d               # mask absorbs the softmax scale too
        mask_args = (m,)

    kernel = _make_attn_kernel(heads_per_block, head_size, gsz, has_mask,
                               output_attentions, compute_dtype, out_dtype)

    # ---- compiler params: explicit VMEM budget sized from the footprint -------------
    cp_kwargs = dict(dimension_semantics=("parallel", "parallel"))
    if vmem_cap is not None:
        wb = jnp.dtype(compute_dtype).itemsize
        ob = jnp.dtype(out_dtype).itemsize
        est = 2 * (nhb * H * 3 * gsz * wb + nhb * 3 * gsz * 4)   # weights+bias (worst case 2x)
        est += 2 * S * H * wb                                     # hs block, double-buffered
        if has_mask:
            est += 2 * Sm * S * 4
        est += 2 * S * gsz * ob                                   # ctx block, double-buffered
        if output_attentions:
            est += 2 * heads_per_block * S * S * 4                # scores block
        est += S * 3 * gsz * (4 + wb) + 4 * S * S * 4 + (4 << 20)  # in-kernel temporaries
        cp_kwargs["vmem_limit_bytes"] = int(min(vmem_cap, max(int(est * 1.25), 32 << 20)))
    compiler_params = pltpu.CompilerParams(**cp_kwargs)

    def _run(single_buffer_weights):
        def const_spec(shape):
            # Constant index_map -> fetched once; request single buffering to avoid a dead
            # second weight buffer in VMEM.
            if single_buffer_weights:
                return pl.BlockSpec(shape, lambda b, hb: (0, 0, 0),
                                    pipeline_mode=pl.Buffered(1))
            return pl.BlockSpec(shape, lambda b, hb: (0, 0, 0))

        in_specs = [
            # hidden_states: index_map ignores hb -> reused across the head-block axis.
            pl.BlockSpec((1, S, H), lambda b, hb: (b, 0, 0)),
            const_spec((nhb, H, 3 * gsz)),
            const_spec((nhb, 1, 3 * gsz)),
        ]
        if has_mask:
            in_specs.append(pl.BlockSpec((1, Sm, S), lambda b, hb: (b, 0, 0)))

        ctx_shape = jax.ShapeDtypeStruct((B, S, H), out_dtype)
        ctx_spec = pl.BlockSpec((1, S, gsz), lambda b, hb: (b, 0, hb))
        if output_attentions:
            out_shape = (ctx_shape,
                         jax.ShapeDtypeStruct((B, num_heads, S, S), jnp.float32))
            out_specs = [ctx_spec,
                         pl.BlockSpec((1, heads_per_block, S, S),
                                      lambda b, hb: (b, hb, 0, 0))]
        else:
            out_shape = ctx_shape
            out_specs = ctx_spec

        return pl.pallas_call(
            kernel,
            out_shape=out_shape,
            grid_spec=pltpu.PrefetchScalarGridSpec(
                num_scalar_prefetch=0,
                grid=(B, nhb),                  # head-block axis innermost: hs/mask reuse
                in_specs=in_specs,
                out_specs=out_specs,
            ),
            compiler_params=compiler_params,
        )(hs_c, wqkv, bqkv, *mask_args)

    try:
        out = _run(True)
    except Exception:
        # TODO(synk): pl.Buffered(1) single-buffering of the constant weight blocks is not
        # supported on this jax version; fall back to default double buffering.
        out = _run(False)

    if output_attentions:
        result, scores = out
        return (result, scores)
    return (out,)


def _reference(hidden_states, wq, bq, wk, bk, wv, bv, attention_mask, num_heads):
    B, S, H = hidden_states.shape
    hd = H // num_heads

    def proj(w, b):
        y = hidden_states @ w.T + b
        return y.reshape(B, S, num_heads, hd).transpose(0, 2, 1, 3)

    Q, K, V = proj(wq, bq), proj(wk, bk), proj(wv, bv)
    scores = jnp.einsum("bhqd,bhkd->bhqk", Q, K)
    if attention_mask is not None:
        m = attention_mask
        if m.ndim == 3:
            m = m[:, None, :, :]
        scores = scores + m
    probs = jax.nn.softmax(scores / math.sqrt(hd), axis=-1)
    ctx = jnp.einsum("bhqk,bhkd->bhqd", probs, V)
    return ctx.transpose(0, 2, 1, 3).reshape(B, S, H), scores


if __name__ == "__main__":
    B, S, H, num_heads = 2, 8, 32, 4

    key = jax.random.PRNGKey(0)
    ks = jax.random.split(key, 7)
    hidden_states = jax.random.normal(ks[0], (B, S, H), jnp.float32)
    scale = 1.0 / math.sqrt(H)
    wq = jax.random.uniform(ks[1], (H, H), jnp.float32, -scale, scale)
    wk = jax.random.uniform(ks[2], (H, H), jnp.float32, -scale, scale)
    wv = jax.random.uniform(ks[3], (H, H), jnp.float32, -scale, scale)
    bq = jax.random.uniform(ks[4], (H,), jnp.float32, -scale, scale)
    bk = jax.random.uniform(ks[5], (H,), jnp.float32, -scale, scale)
    bv = jax.random.uniform(ks[6], (H,), jnp.float32, -scale, scale)

    # Tolerances: the f32-compute run is limited by the approximate EUP reciprocal in the
    # softmax denominator; the default bf16-compute runs additionally carry bf16 MXU
    # operand rounding.
    F32_RES_TOL = dict(atol=5e-3, rtol=5e-3)
    BF16_RES_TOL = dict(atol=3e-2, rtol=3e-2)

    # 1) Full (B, S, S) additive mask + output_attentions=True.  Use f32 compute here so
    #    the returned pre-softmax scores match the f32 reference tightly.
    full_mask = jnp.zeros((B, S, S), jnp.float32).at[1, :, -2:].set(-10000.0)
    result, scores = custom_bert_self_attention(
        hidden_states, wq, bq, wk, bk, wv, bv, full_mask,
        num_heads=num_heads, output_attentions=True, compute_dtype=jnp.float32)
    jax.block_until_ready((result, scores))
    ref_result, ref_scores = _reference(
        hidden_states, wq, bq, wk, bk, wv, bv, full_mask, num_heads)
    np.testing.assert_allclose(np.asarray(result), np.asarray(ref_result), **F32_RES_TOL)
    np.testing.assert_allclose(np.asarray(scores), np.asarray(ref_scores),
                               atol=2e-4, rtol=2e-4)

    # 2) No mask, output_attentions=False, default bf16 MXU compute
    #    (scores never computed or written to HBM).
    (result_nm,) = custom_bert_self_attention(
        hidden_states, wq, bq, wk, bk, wv, bv, None,
        num_heads=num_heads, output_attentions=False)
    jax.block_until_ready(result_nm)
    ref_nm, _ = _reference(hidden_states, wq, bq, wk, bk, wv, bv, None, num_heads)
    np.testing.assert_allclose(np.asarray(result_nm), np.asarray(ref_nm), **BF16_RES_TOL)

    # 3) BERT-style (B, 1, 1, S) key mask, broadcast inside the kernel, default bf16.
    key_mask = jnp.zeros((B, 1, 1, S), jnp.float32).at[1, :, :, -2:].set(-10000.0)
    (result_km,) = custom_bert_self_attention(
        hidden_states, wq, bq, wk, bk, wv, bv, key_mask,
        num_heads=num_heads, output_attentions=False)
    jax.block_until_ready(result_km)
    ref_km, _ = _reference(hidden_states, wq, bq, wk, bk, wv, bv, key_mask, num_heads)
    np.testing.assert_allclose(np.asarray(result_km), np.asarray(ref_km), **BF16_RES_TOL)

    print("KERNEL_OK")
</pallas_src>

<mosaic_0001>
module attributes {stable_mosaic.version = 11 : i64} {
  func.func @kernel(%arg0: i32, %arg1: i32, %arg2: memref<1x8x32xf32, #tpu.memory_space<vmem>>, %arg3: memref<1x32x96xf32, #tpu.memory_space<vmem>>, %arg4: memref<1x1x96xf32, #tpu.memory_space<vmem>>, %arg5: memref<1x8x8xf32, #tpu.memory_space<vmem>>, %arg6: memref<1x8x32xf32, #tpu.memory_space<vmem>>, %arg7: memref<1x4x8x8xf32, #tpu.memory_space<vmem>>) attributes {dimension_semantics = [#tpu.dimension_semantics<parallel>, #tpu.dimension_semantics<parallel>], iteration_bounds = array<i64: 2, 1>, scalar_prefetch = 0 : i64, scratch_operands = 0 : i64, tpu.core_type = #tpu.core_type<tc>, window_params = [{transform_indices = @transform_0, window_bounds = array<i64: 1, 8, 32>}, {pipeline_mode = #tpu.pipeline_mode<synchronous>, transform_indices = @transform_1, window_bounds = array<i64: 1, 32, 96>}, {pipeline_mode = #tpu.pipeline_mode<synchronous>, transform_indices = @transform_2, window_bounds = array<i64: 1, 1, 96>}, {transform_indices = @transform_3, window_bounds = array<i64: 1, 8, 8>}, {transform_indices = @transform_4, window_bounds = array<i64: 1, 8, 32>}, {transform_indices = @transform_5, window_bounds = array<i64: 1, 4, 8, 8>}]} {
    %c0 = arith.constant 0 : index
    %c0_0 = arith.constant 0 : index
    %c0_1 = arith.constant 0 : index
    %0 = vector.load %arg2[%c0, %c0_0, %c0_1] : memref<1x8x32xf32, #tpu.memory_space<vmem>>, vector<1x8x32xf32>
    %1 = vector.shape_cast %0 : vector<1x8x32xf32> to vector<8x32xf32>
    %2 = arith.index_cast %arg1 : i32 to index
    %c0_2 = arith.constant 0 : index
    %c0_3 = arith.constant 0 : index
    %3 = vector.load %arg3[%2, %c0_2, %c0_3] : memref<1x32x96xf32, #tpu.memory_space<vmem>>, vector<1x32x96xf32>
    %4 = vector.shape_cast %3 : vector<1x32x96xf32> to vector<32x96xf32>
    %cst = arith.constant dense<0.000000e+00> : vector<8x96xf32>
    %5 = tpu.matmul %1, %4, %cst {dimension_numbers = #tpu.dot_dimension_numbers<[1], [0], [0], [1], [0, 0, 1, 1], [], []>} : vector<8x32xf32>, vector<32x96xf32>, vector<8x96xf32> -> vector<8x96xf32>
    %6 = arith.index_cast %arg1 : i32 to index
    %c0_4 = arith.constant 0 : index
    %c0_5 = arith.constant 0 : index
    %7 = vector.load %arg4[%6, %c0_4, %c0_5] : memref<1x1x96xf32, #tpu.memory_space<vmem>>, vector<1x1x96xf32>
    %8 = vector.shape_cast %7 : vector<1x1x96xf32> to vector<1x96xf32>
    %9 = vector.broadcast %8 : vector<1x96xf32> to vector<8x96xf32>
    %10 = arith.addf %5, %9 : vector<8x96xf32>
    %c0_6 = arith.constant 0 : index
    %c0_7 = arith.constant 0 : index
    %c0_8 = arith.constant 0 : index
    %11 = vector.load %arg5[%c0_6, %c0_7, %c0_8] : memref<1x8x8xf32, #tpu.memory_space<vmem>>, vector<1x8x8xf32>
    %12 = vector.shape_cast %11 : vector<1x8x8xf32> to vector<8x8xf32>
    %13 = vector.extract_strided_slice %10 {offsets = [0, 0], sizes = [8, 8], strides = [1, 1]} : vector<8x96xf32> to vector<8x8xf32>
    %14 = vector.extract_strided_slice %10 {offsets = [0, 32], sizes = [8, 8], strides = [1, 1]} : vector<8x96xf32> to vector<8x8xf32>
    %15 = vector.extract_strided_slice %10 {offsets = [0, 64], sizes = [8, 8], strides = [1, 1]} : vector<8x96xf32> to vector<8x8xf32>
    %cst_9 = arith.constant dense<0.000000e+00> : vector<8x8xf32>
    %16 = tpu.matmul %13, %14, %cst_9 {dimension_numbers = #tpu.dot_dimension_numbers<[1], [1], [0], [0], [0, 0, 1, 0], [], []>} : vector<8x8xf32>, vector<8x8xf32>, vector<8x8xf32> -> vector<8x8xf32>
    %17 = arith.addf %16, %12 : vector<8x8xf32>
    %c0_10 = arith.constant 0 : index
    %c0_11 = arith.constant 0 : index
    %c0_12 = arith.constant 0 : index
    %c0_13 = arith.constant 0 : index
    %18 = vector.load %arg7[%c0_10, %c0_11, %c0_12, %c0_13] : memref<1x4x8x8xf32, #tpu.memory_space<vmem>>, vector<1x1x8x8xf32>
    %19 = vector.shape_cast %18 : vector<1x1x8x8xf32> to vector<8x8xf32>
    %20 = vector.shape_cast %17 : vector<8x8xf32> to vector<1x1x8x8xf32>
    tpu.vector_store %arg7[%c0_10, %c0_11, %c0_12, %c0_13], %20 {strides = array<i32>} : memref<1x4x8x8xf32, #tpu.memory_space<vmem>>, vector<1x1x8x8xf32>,
    %cst_14 = arith.constant 0.353553385 : f32
    %21 = vector.broadcast %cst_14 : f32 to vector<8x8xf32>
    %22 = arith.mulf %17, %21 : vector<8x8xf32>
    %cst_15 = arith.constant dense<0xFF800000> : vector<8xf32>
    %23 = vector.multi_reduction <maximumf>, %22, %cst_15 [1] : vector<8x8xf32> to vector<8xf32>
    %24 = vector.shape_cast %23 : vector<8xf32> to vector<8x1xf32>
    %25 = vector.broadcast %24 : vector<8x1xf32> to vector<8x8xf32>
    %26 = arith.subf %22, %25 : vector<8x8xf32>
    %27 = math.exp %26 : vector<8x8xf32>
    %cst_16 = arith.constant dense<0.000000e+00> : vector<8xf32>
    %28 = vector.multi_reduction <add>, %27, %cst_16 [1] : vector<8x8xf32> to vector<8xf32>
    %29 = vector.shape_cast %28 : vector<8xf32> to vector<8x1xf32>
    %30 = tpu.reciprocal %29 {approx = true} : vector<8x1xf32> -> vector<8x1xf32>
    %31 = vector.broadcast %30 : vector<8x1xf32> to vector<8x8xf32>
    %32 = arith.mulf %27, %31 : vector<8x8xf32>
    %cst_17 = arith.constant dense<0.000000e+00> : vector<8x8xf32>
    %33 = tpu.matmul %32, %15, %cst_17 {dimension_numbers = #tpu.dot_dimension_numbers<[1], [0], [0], [1], [0, 0, 1, 1], [], []>} : vector<8x8xf32>, vector<8x8xf32>, vector<8x8xf32> -> vector<8x8xf32>
    %34 = vector.extract_strided_slice %10 {offsets = [0, 8], sizes = [8, 8], strides = [1, 1]} : vector<8x96xf32> to vector<8x8xf32>
    %35 = vector.extract_strided_slice %10 {offsets = [0, 40], sizes = [8, 8], strides = [1, 1]} : vector<8x96xf32> to vector<8x8xf32>
    %36 = vector.extract_strided_slice %10 {offsets = [0, 72], sizes = [8, 8], strides = [1, 1]} : vector<8x96xf32> to vector<8x8xf32>
    %cst_18 = arith.constant dense<0.000000e+00> : vector<8x8xf32>
    %37 = tpu.matmul %34, %35, %cst_18 {dimension_numbers = #tpu.dot_dimension_numbers<[1], [1], [0], [0], [0, 0, 1, 0], [], []>} : vector<8x8xf32>, vector<8x8xf32>, vector<8x8xf32> -> vector<8x8xf32>
    %38 = arith.addf %37, %12 : vector<8x8xf32>
    %c0_19 = arith.constant 0 : index
    %c1 = arith.constant 1 : index
    %c0_20 = arith.constant 0 : index
    %c0_21 = arith.constant 0 : index
    %39 = vector.load %arg7[%c0_19, %c1, %c0_20, %c0_21] : memref<1x4x8x8xf32, #tpu.memory_space<vmem>>, vector<1x1x8x8xf32>
    %40 = vector.shape_cast %39 : vector<1x1x8x8xf32> to vector<8x8xf32>
    %41 = vector.shape_cast %38 : vector<8x8xf32> to vector<1x1x8x8xf32>
    tpu.vector_store %arg7[%c0_19, %c1, %c0_20, %c0_21], %41 {strides = array<i32>} : memref<1x4x8x8xf32, #tpu.memory_space<vmem>>, vector<1x1x8x8xf32>,
    %cst_22 = arith.constant 0.353553385 : f32
    %42 = vector.broadcast %cst_22 : f32 to vector<8x8xf32>
    %43 = arith.mulf %38, %42 : vector<8x8xf32>
    %cst_23 = arith.constant dense<0xFF800000> : vector<8xf32>
    %44 = vector.multi_reduction <maximumf>, %43, %cst_23 [1] : vector<8x8xf32> to vector<8xf32>
    %45 = vector.shape_cast %44 : vector<8xf32> to vector<8x1xf32>
    %46 = vector.broadcast %45 : vector<8x1xf32> to vector<8x8xf32>
    %47 = arith.subf %43, %46 : vector<8x8xf32>
    %48 = math.exp %47 : vector<8x8xf32>
    %cst_24 = arith.constant dense<0.000000e+00> : vector<8xf32>
    %49 = vector.multi_reduction <add>, %48, %cst_24 [1] : vector<8x8xf32> to vector<8xf32>
    %50 = vector.shape_cast %49 : vector<8xf32> to vector<8x1xf32>
    %51 = tpu.reciprocal %50 {approx = true} : vector<8x1xf32> -> vector<8x1xf32>
    %52 = vector.broadcast %51 : vector<8x1xf32> to vector<8x8xf32>
    %53 = arith.mulf %48, %52 : vector<8x8xf32>
    %cst_25 = arith.constant dense<0.000000e+00> : vector<8x8xf32>
    %54 = tpu.matmul %53, %36, %cst_25 {dimension_numbers = #tpu.dot_dimension_numbers<[1], [0], [0], [1], [0, 0, 1, 1], [], []>} : vector<8x8xf32>, vector<8x8xf32>, vector<8x8xf32> -> vector<8x8xf32>
    %55 = vector.extract_strided_slice %10 {offsets = [0, 16], sizes = [8, 8], strides = [1, 1]} : vector<8x96xf32> to vector<8x8xf32>
    %56 = vector.extract_strided_slice %10 {offsets = [0, 48], sizes = [8, 8], strides = [1, 1]} : vector<8x96xf32> to vector<8x8xf32>
    %57 = vector.extract_strided_slice %10 {offsets = [0, 80], sizes = [8, 8], strides = [1, 1]} : vector<8x96xf32> to vector<8x8xf32>
    %cst_26 = arith.constant dense<0.000000e+00> : vector<8x8xf32>
    %58 = tpu.matmul %55, %56, %cst_26 {dimension_numbers = #tpu.dot_dimension_numbers<[1], [1], [0], [0], [0, 0, 1, 0], [], []>} : vector<8x8xf32>, vector<8x8xf32>, vector<8x8xf32> -> vector<8x8xf32>
    %59 = arith.addf %58, %12 : vector<8x8xf32>
    %c0_27 = arith.constant 0 : index
    %c2 = arith.constant 2 : index
    %c0_28 = arith.constant 0 : index
    %c0_29 = arith.constant 0 : index
    %60 = vector.load %arg7[%c0_27, %c2, %c0_28, %c0_29] : memref<1x4x8x8xf32, #tpu.memory_space<vmem>>, vector<1x1x8x8xf32>
    %61 = vector.shape_cast %60 : vector<1x1x8x8xf32> to vector<8x8xf32>
    %62 = vector.shape_cast %59 : vector<8x8xf32> to vector<1x1x8x8xf32>
    tpu.vector_store %arg7[%c0_27, %c2, %c0_28, %c0_29], %62 {strides = array<i32>} : memref<1x4x8x8xf32, #tpu.memory_space<vmem>>, vector<1x1x8x8xf32>,
    %cst_30 = arith.constant 0.353553385 : f32
    %63 = vector.broadcast %cst_30 : f32 to vector<8x8xf32>
    %64 = arith.mulf %59, %63 : vector<8x8xf32>
    %cst_31 = arith.constant dense<0xFF800000> : vector<8xf32>
    %65 = vector.multi_reduction <maximumf>, %64, %cst_31 [1] : vector<8x8xf32> to vector<8xf32>
    %66 = vector.shape_cast %65 : vector<8xf32> to vector<8x1xf32>
    %67 = vector.broadcast %66 : vector<8x1xf32> to vector<8x8xf32>
    %68 = arith.subf %64, %67 : vector<8x8xf32>
    %69 = math.exp %68 : vector<8x8xf32>
    %cst_32 = arith.constant dense<0.000000e+00> : vector<8xf32>
    %70 = vector.multi_reduction <add>, %69, %cst_32 [1] : vector<8x8xf32> to vector<8xf32>
    %71 = vector.shape_cast %70 : vector<8xf32> to vector<8x1xf32>
    %72 = tpu.reciprocal %71 {approx = true} : vector<8x1xf32> -> vector<8x1xf32>
    %73 = vector.broadcast %72 : vector<8x1xf32> to vector<8x8xf32>
    %74 = arith.mulf %69, %73 : vector<8x8xf32>
    %cst_33 = arith.constant dense<0.000000e+00> : vector<8x8xf32>
    %75 = tpu.matmul %74, %57, %cst_33 {dimension_numbers = #tpu.dot_dimension_numbers<[1], [0], [0], [1], [0, 0, 1, 1], [], []>} : vector<8x8xf32>, vector<8x8xf32>, vector<8x8xf32> -> vector<8x8xf32>
    %76 = vector.extract_strided_slice %10 {offsets = [0, 24], sizes = [8, 8], strides = [1, 1]} : vector<8x96xf32> to vector<8x8xf32>
    %77 = vector.extract_strided_slice %10 {offsets = [0, 56], sizes = [8, 8], strides = [1, 1]} : vector<8x96xf32> to vector<8x8xf32>
    %78 = vector.extract_strided_slice %10 {offsets = [0, 88], sizes = [8, 8], strides = [1, 1]} : vector<8x96xf32> to vector<8x8xf32>
    %cst_34 = arith.constant dense<0.000000e+00> : vector<8x8xf32>
    %79 = tpu.matmul %76, %77, %cst_34 {dimension_numbers = #tpu.dot_dimension_numbers<[1], [1], [0], [0], [0, 0, 1, 0], [], []>} : vector<8x8xf32>, vector<8x8xf32>, vector<8x8xf32> -> vector<8x8xf32>
    %80 = arith.addf %79, %12 : vector<8x8xf32>
    %c0_35 = arith.constant 0 : index
    %c3 = arith.constant 3 : index
    %c0_36 = arith.constant 0 : index
    %c0_37 = arith.constant 0 : index
    %81 = vector.load %arg7[%c0_35, %c3, %c0_36, %c0_37] : memref<1x4x8x8xf32, #tpu.memory_space<vmem>>, vector<1x1x8x8xf32>
    %82 = vector.shape_cast %81 : vector<1x1x8x8xf32> to vector<8x8xf32>
    %83 = vector.shape_cast %80 : vector<8x8xf32> to vector<1x1x8x8xf32>
    tpu.vector_store %arg7[%c0_35, %c3, %c0_36, %c0_37], %83 {strides = array<i32>} : memref<1x4x8x8xf32, #tpu.memory_space<vmem>>, vector<1x1x8x8xf32>,
    %cst_38 = arith.constant 0.353553385 : f32
    %84 = vector.broadcast %cst_38 : f32 to vector<8x8xf32>
    %85 = arith.mulf %80, %84 : vector<8x8xf32>
    %cst_39 = arith.constant dense<0xFF800000> : vector<8xf32>
    %86 = vector.multi_reduction <maximumf>, %85, %cst_39 [1] : vector<8x8xf32> to vector<8xf32>
    %87 = vector.shape_cast %86 : vector<8xf32> to vector<8x1xf32>
    %88 = vector.broadcast %87 : vector<8x1xf32> to vector<8x8xf32>
    %89 = arith.subf %85, %88 : vector<8x8xf32>
    %90 = math.exp %89 : vector<8x8xf32>
    %cst_40 = arith.constant dense<0.000000e+00> : vector<8xf32>
    %91 = vector.multi_reduction <add>, %90, %cst_40 [1] : vector<8x8xf32> to vector<8xf32>
    %92 = vector.shape_cast %91 : vector<8xf32> to vector<8x1xf32>
    %93 = tpu.reciprocal %92 {approx = true} : vector<8x1xf32> -> vector<8x1xf32>
    %94 = vector.broadcast %93 : vector<8x1xf32> to vector<8x8xf32>
    %95 = arith.mulf %90, %94 : vector<8x8xf32>
    %cst_41 = arith.constant dense<0.000000e+00> : vector<8x8xf32>
    %96 = tpu.matmul %95, %78, %cst_41 {dimension_numbers = #tpu.dot_dimension_numbers<[1], [0], [0], [1], [0, 0, 1, 1], [], []>} : vector<8x8xf32>, vector<8x8xf32>, vector<8x8xf32> -> vector<8x8xf32>
    %97 = tpu.concatenate %33, %54, %75, %96 in 1 : vector<8x8xf32>, vector<8x8xf32>, vector<8x8xf32>, vector<8x8xf32> -> vector<8x32xf32>
    %c0_42 = arith.constant 0 : index
    %c0_43 = arith.constant 0 : index
    %c0_44 = arith.constant 0 : index
    %98 = vector.load %arg6[%c0_42, %c0_43, %c0_44] : memref<1x8x32xf32, #tpu.memory_space<vmem>>, vector<1x8x32xf32>
    %99 = vector.shape_cast %98 : vector<1x8x32xf32> to vector<8x32xf32>
    %100 = vector.shape_cast %97 : vector<8x32xf32> to vector<1x8x32xf32>
    tpu.vector_store %arg6[%c0_42, %c0_43, %c0_44], %100 {strides = array<i32>} : memref<1x8x32xf32, #tpu.memory_space<vmem>>, vector<1x8x32xf32>,
    return
  }
  func.func @transform_0(%arg0: i32, %arg1: i32) -> (i32, i32, i32) {
    %c0_i32 = arith.constant 0 : i32
    %c0_i32_0 = arith.constant 0 : i32
    %c0_i32_1 = arith.constant 0 : i32
    return %arg0, %c0_i32, %c0_i32_0 : i32, i32, i32
  }
  func.func @transform_1(%arg0: i32, %arg1: i32) -> (i32, i32, i32) {
    %c0_i32 = arith.constant 0 : i32
    %c0_i32_0 = arith.constant 0 : i32
    %c0_i32_1 = arith.constant 0 : i32
    %c0_i32_2 = arith.constant 0 : i32
    return %c0_i32, %c0_i32_0, %c0_i32_1 : i32, i32, i32
  }
  func.func @transform_2(%arg0: i32, %arg1: i32) -> (i32, i32, i32) {
    %c0_i32 = arith.constant 0 : i32
    %c0_i32_0 = arith.constant 0 : i32
    %c0_i32_1 = arith.constant 0 : i32
    %c0_i32_2 = arith.constant 0 : i32
    return %c0_i32, %c0_i32_0, %c0_i32_1 : i32, i32, i32
  }
  func.func @transform_3(%arg0: i32, %arg1: i32) -> (i32, i32, i32) {
    %c0_i32 = arith.constant 0 : i32
    %c0_i32_0 = arith.constant 0 : i32
    %c0_i32_1 = arith.constant 0 : i32
    return %arg0, %c0_i32, %c0_i32_0 : i32, i32, i32
  }
  func.func @transform_4(%arg0: i32, %arg1: i32) -> (i32, i32, i32) {
    %c0_i32 = arith.constant 0 : i32
    %c0_i32_0 = arith.constant 0 : i32
    return %arg0, %c0_i32, %arg1 : i32, i32, i32
  }
  func.func @transform_5(%arg0: i32, %arg1: i32) -> (i32, i32, i32, i32) {
    %c0_i32 = arith.constant 0 : i32
    %c0_i32_0 = arith.constant 0 : i32
    %c0_i32_1 = arith.constant 0 : i32
    return %arg0, %arg1, %c0_i32, %c0_i32_0 : i32, i32, i32, i32
  }
}

module attributes {stable_mosaic.version = 11 : i64} {
  func.func @kernel(%arg0: i32, %arg1: i32, %arg2: memref<1x8x32xf32, #tpu.memory_space<vmem>>, %arg3: memref<1x32x96xf32, #tpu.memory_space<vmem>>, %arg4: memref<1x1x96xf32, #tpu.memory_space<vmem>>, %arg5: memref<1x8x8xf32, #tpu.memory_space<vmem>>, %arg6: memref<1x8x32xf32, #tpu.memory_space<vmem>>, %arg7: memref<1x4x8x8xf32, #tpu.memory_space<vmem>>) attributes {dimension_semantics = [#tpu.dimension_semantics<parallel>, #tpu.dimension_semantics<parallel>], iteration_bounds = array<i64: 2, 1>, scalar_prefetch = 0 : i64, scratch_operands = 0 : i64, tpu.core_type = #tpu.core_type<tc>, window_params = [{transform_indices = @transform_0, window_bounds = array<i64: 1, 8, 32>}, {pipeline_mode = #tpu.pipeline_mode<synchronous>, transform_indices = @transform_1, window_bounds = array<i64: 1, 32, 96>}, {pipeline_mode = #tpu.pipeline_mode<synchronous>, transform_indices = @transform_2, window_bounds = array<i64: 1, 1, 96>}, {transform_indices = @transform_3, window_bounds = array<i64: 1, 8, 8>}, {transform_indices = @transform_4, window_bounds = array<i64: 1, 8, 32>}, {transform_indices = @transform_5, window_bounds = array<i64: 1, 4, 8, 8>}]} {
    %c0 = arith.constant 0 : index
    %c0_0 = arith.constant 0 : index
    %c0_1 = arith.constant 0 : index
    %0 = vector.load %arg2[%c0, %c0_0, %c0_1] : memref<1x8x32xf32, #tpu.memory_space<vmem>>, vector<1x8x32xf32>
    %1 = vector.shape_cast %0 : vector<1x8x32xf32> to vector<8x32xf32>
    %2 = arith.index_cast %arg1 : i32 to index
    %c0_2 = arith.constant 0 : index
    %c0_3 = arith.constant 0 : index
    %3 = vector.load %arg3[%2, %c0_2, %c0_3] : memref<1x32x96xf32, #tpu.memory_space<vmem>>, vector<1x32x96xf32>
    %4 = vector.shape_cast %3 : vector<1x32x96xf32> to vector<32x96xf32>
    %cst = arith.constant dense<0.000000e+00> : vector<8x96xf32>
    %5 = tpu.matmul %1, %4, %cst {dimension_numbers = #tpu.dot_dimension_numbers<[1], [0], [0], [1], [0, 0, 1, 1], [], []>} : vector<8x32xf32>, vector<32x96xf32>, vector<8x96xf32> -> vector<8x96xf32>
    %6 = arith.index_cast %arg1 : i32 to index
    %c0_4 = arith.constant 0 : index
    %c0_5 = arith.constant 0 : index
    %7 = vector.load %arg4[%6, %c0_4, %c0_5] : memref<1x1x96xf32, #tpu.memory_space<vmem>>, vector<1x1x96xf32>
    %8 = vector.shape_cast %7 : vector<1x1x96xf32> to vector<1x96xf32>
    %9 = vector.broadcast %8 : vector<1x96xf32> to vector<8x96xf32>
    %10 = arith.addf %5, %9 : vector<8x96xf32>
    %c0_6 = arith.constant 0 : index
    %c0_7 = arith.constant 0 : index
    %c0_8 = arith.constant 0 : index
    %11 = vector.load %arg5[%c0_6, %c0_7, %c0_8] : memref<1x8x8xf32, #tpu.memory_space<vmem>>, vector<1x8x8xf32>
    %12 = vector.shape_cast %11 : vector<1x8x8xf32> to vector<8x8xf32>
    %13 = vector.extract_strided_slice %10 {offsets = [0, 0], sizes = [8, 8], strides = [1, 1]} : vector<8x96xf32> to vector<8x8xf32>
    %14 = vector.extract_strided_slice %10 {offsets = [0, 32], sizes = [8, 8], strides = [1, 1]} : vector<8x96xf32> to vector<8x8xf32>
    %15 = vector.extract_strided_slice %10 {offsets = [0, 64], sizes = [8, 8], strides = [1, 1]} : vector<8x96xf32> to vector<8x8xf32>
    %cst_9 = arith.constant dense<0.000000e+00> : vector<8x8xf32>
    %16 = tpu.matmul %13, %14, %cst_9 {dimension_numbers = #tpu.dot_dimension_numbers<[1], [1], [0], [0], [0, 0, 1, 0], [], []>} : vector<8x8xf32>, vector<8x8xf32>, vector<8x8xf32> -> vector<8x8xf32>
    %17 = arith.addf %16, %12 : vector<8x8xf32>
    %c0_10 = arith.constant 0 : index
    %c0_11 = arith.constant 0 : index
    %c0_12 = arith.constant 0 : index
    %c0_13 = arith.constant 0 : index
    %18 = vector.load %arg7[%c0_10, %c0_11, %c0_12, %c0_13] : memref<1x4x8x8xf32, #tpu.memory_space<vmem>>, vector<1x1x8x8xf32>
    %19 = vector.shape_cast %18 : vector<1x1x8x8xf32> to vector<8x8xf32>
    %20 = vector.shape_cast %17 : vector<8x8xf32> to vector<1x1x8x8xf32>
    tpu.vector_store %arg7[%c0_10, %c0_11, %c0_12, %c0_13], %20 {strides = array<i32>} : memref<1x4x8x8xf32, #tpu.memory_space<vmem>>, vector<1x1x8x8xf32>,
    %cst_14 = arith.constant 0.353553385 : f32
    %21 = vector.broadcast %cst_14 : f32 to vector<8x8xf32>
    %22 = arith.mulf %17, %21 : vector<8x8xf32>
    %cst_15 = arith.constant dense<0xFF800000> : vector<8xf32>
    %23 = vector.multi_reduction <maximumf>, %22, %cst_15 [1] : vector<8x8xf32> to vector<8xf32>
    %24 = vector.shape_cast %23 : vector<8xf32> to vector<8x1xf32>
    %25 = vector.broadcast %24 : vector<8x1xf32> to vector<8x8xf32>
    %26 = arith.subf %22, %25 : vector<8x8xf32>
    %27 = math.exp %26 : vector<8x8xf32>
    %cst_16 = arith.constant dense<0.000000e+00> : vector<8xf32>
    %28 = vector.multi_reduction <add>, %27, %cst_16 [1] : vector<8x8xf32> to vector<8xf32>
    %29 = vector.shape_cast %28 : vector<8xf32> to vector<8x1xf32>
    %30 = tpu.reciprocal %29 {approx = true} : vector<8x1xf32> -> vector<8x1xf32>
    %31 = vector.broadcast %30 : vector<8x1xf32> to vector<8x8xf32>
    %32 = arith.mulf %27, %31 : vector<8x8xf32>
    %cst_17 = arith.constant dense<0.000000e+00> : vector<8x8xf32>
    %33 = tpu.matmul %32, %15, %cst_17 {dimension_numbers = #tpu.dot_dimension_numbers<[1], [0], [0], [1], [0, 0, 1, 1], [], []>} : vector<8x8xf32>, vector<8x8xf32>, vector<8x8xf32> -> vector<8x8xf32>
    %34 = vector.extract_strided_slice %10 {offsets = [0, 8], sizes = [8, 8], strides = [1, 1]} : vector<8x96xf32> to vector<8x8xf32>
    %35 = vector.extract_strided_slice %10 {offsets = [0, 40], sizes = [8, 8], strides = [1, 1]} : vector<8x96xf32> to vector<8x8xf32>
    %36 = vector.extract_strided_slice %10 {offsets = [0, 72], sizes = [8, 8], strides = [1, 1]} : vector<8x96xf32> to vector<8x8xf32>
    %cst_18 = arith.constant dense<0.000000e+00> : vector<8x8xf32>
    %37 = tpu.matmul %34, %35, %cst_18 {dimension_numbers = #tpu.dot_dimension_numbers<[1], [1], [0], [0], [0, 0, 1, 0], [], []>} : vector<8x8xf32>, vector<8x8xf32>, vector<8x8xf32> -> vector<8x8xf32>
    %38 = arith.addf %37, %12 : vector<8x8xf32>
    %c0_19 = arith.constant 0 : index
    %c1 = arith.constant 1 : index
    %c0_20 = arith.constant 0 : index
    %c0_21 = arith.constant 0 : index
    %39 = vector.load %arg7[%c0_19, %c1, %c0_20, %c0_21] : memref<1x4x8x8xf32, #tpu.memory_space<vmem>>, vector<1x1x8x8xf32>
    %40 = vector.shape_cast %39 : vector<1x1x8x8xf32> to vector<8x8xf32>
    %41 = vector.shape_cast %38 : vector<8x8xf32> to vector<1x1x8x8xf32>
    tpu.vector_store %arg7[%c0_19, %c1, %c0_20, %c0_21], %41 {strides = array<i32>} : memref<1x4x8x8xf32, #tpu.memory_space<vmem>>, vector<1x1x8x8xf32>,
    %cst_22 = arith.constant 0.353553385 : f32
    %42 = vector.broadcast %cst_22 : f32 to vector<8x8xf32>
    %43 = arith.mulf %38, %42 : vector<8x8xf32>
    %cst_23 = arith.constant dense<0xFF800000> : vector<8xf32>
    %44 = vector.multi_reduction <maximumf>, %43, %cst_23 [1] : vector<8x8xf32> to vector<8xf32>
    %45 = vector.shape_cast %44 : vector<8xf32> to vector<8x1xf32>
    %46 = vector.broadcast %45 : vector<8x1xf32> to vector<8x8xf32>
    %47 = arith.subf %43, %46 : vector<8x8xf32>
    %48 = math.exp %47 : vector<8x8xf32>
    %cst_24 = arith.constant dense<0.000000e+00> : vector<8xf32>
    %49 = vector.multi_reduction <add>, %48, %cst_24 [1] : vector<8x8xf32> to vector<8xf32>
    %50 = vector.shape_cast %49 : vector<8xf32> to vector<8x1xf32>
    %51 = tpu.reciprocal %50 {approx = true} : vector<8x1xf32> -> vector<8x1xf32>
    %52 = vector.broadcast %51 : vector<8x1xf32> to vector<8x8xf32>
    %53 = arith.mulf %48, %52 : vector<8x8xf32>
    %cst_25 = arith.constant dense<0.000000e+00> : vector<8x8xf32>
    %54 = tpu.matmul %53, %36, %cst_25 {dimension_numbers = #tpu.dot_dimension_numbers<[1], [0], [0], [1], [0, 0, 1, 1], [], []>} : vector<8x8xf32>, vector<8x8xf32>, vector<8x8xf32> -> vector<8x8xf32>
    %55 = vector.extract_strided_slice %10 {offsets = [0, 16], sizes = [8, 8], strides = [1, 1]} : vector<8x96xf32> to vector<8x8xf32>
    %56 = vector.extract_strided_slice %10 {offsets = [0, 48], sizes = [8, 8], strides = [1, 1]} : vector<8x96xf32> to vector<8x8xf32>
    %57 = vector.extract_strided_slice %10 {offsets = [0, 80], sizes = [8, 8], strides = [1, 1]} : vector<8x96xf32> to vector<8x8xf32>
    %cst_26 = arith.constant dense<0.000000e+00> : vector<8x8xf32>
    %58 = tpu.matmul %55, %56, %cst_26 {dimension_numbers = #tpu.dot_dimension_numbers<[1], [1], [0], [0], [0, 0, 1, 0], [], []>} : vector<8x8xf32>, vector<8x8xf32>, vector<8x8xf32> -> vector<8x8xf32>
    %59 = arith.addf %58, %12 : vector<8x8xf32>
    %c0_27 = arith.constant 0 : index
    %c2 = arith.constant 2 : index
    %c0_28 = arith.constant 0 : index
    %c0_29 = arith.constant 0 : index
    %60 = vector.load %arg7[%c0_27, %c2, %c0_28, %c0_29] : memref<1x4x8x8xf32, #tpu.memory_space<vmem>>, vector<1x1x8x8xf32>
    %61 = vector.shape_cast %60 : vector<1x1x8x8xf32> to vector<8x8xf32>
    %62 = vector.shape_cast %59 : vector<8x8xf32> to vector<1x1x8x8xf32>
    tpu.vector_store %arg7[%c0_27, %c2, %c0_28, %c0_29], %62 {strides = array<i32>} : memref<1x4x8x8xf32, #tpu.memory_space<vmem>>, vector<1x1x8x8xf32>,
    %cst_30 = arith.constant 0.353553385 : f32
    %63 = vector.broadcast %cst_30 : f32 to vector<8x8xf32>
    %64 = arith.mulf %59, %63 : vector<8x8xf32>
    %cst_31 = arith.constant dense<0xFF800000> : vector<8xf32>
    %65 = vector.multi_reduction <maximumf>, %64, %cst_31 [1] : vector<8x8xf32> to vector<8xf32>
    %66 = vector.shape_cast %65 : vector<8xf32> to vector<8x1xf32>
    %67 = vector.broadcast %66 : vector<8x1xf32> to vector<8x8xf32>
    %68 = arith.subf %64, %67 : vector<8x8xf32>
    %69 = math.exp %68 : vector<8x8xf32>
    %cst_32 = arith.constant dense<0.000000e+00> : vector<8xf32>
    %70 = vector.multi_reduction <add>, %69, %cst_32 [1] : vector<8x8xf32> to vector<8xf32>
    %71 = vector.shape_cast %70 : vector<8xf32> to vector<8x1xf32>
    %72 = tpu.reciprocal %71 {approx = true} : vector<8x1xf32> -> vector<8x1xf32>
    %73 = vector.broadcast %72 : vector<8x1xf32> to vector<8x8xf32>
    %74 = arith.mulf %69, %73 : vector<8x8xf32>
    %cst_33 = arith.constant dense<0.000000e+00> : vector<8x8xf32>
    %75 = tpu.matmul %74, %57, %cst_33 {dimension_numbers = #tpu.dot_dimension_numbers<[1], [0], [0], [1], [0, 0, 1, 1], [], []>} : vector<8x8xf32>, vector<8x8xf32>, vector<8x8xf32> -> vector<8x8xf32>
    %76 = vector.extract_strided_slice %10 {offsets = [0, 24], sizes = [8, 8], strides = [1, 1]} : vector<8x96xf32> to vector<8x8xf32>
    %77 = vector.extract_strided_slice %10 {offsets = [0, 56], sizes = [8, 8], strides = [1, 1]} : vector<8x96xf32> to vector<8x8xf32>
    %78 = vector.extract_strided_slice %10 {offsets = [0, 88], sizes = [8, 8], strides = [1, 1]} : vector<8x96xf32> to vector<8x8xf32>
    %cst_34 = arith.constant dense<0.000000e+00> : vector<8x8xf32>
    %79 = tpu.matmul %76, %77, %cst_34 {dimension_numbers = #tpu.dot_dimension_numbers<[1], [1], [0], [0], [0, 0, 1, 0], [], []>} : vector<8x8xf32>, vector<8x8xf32>, vector<8x8xf32> -> vector<8x8xf32>
    %80 = arith.addf %79, %12 : vector<8x8xf32>
    %c0_35 = arith.constant 0 : index
    %c3 = arith.constant 3 : index
    %c0_36 = arith.constant 0 : index
    %c0_37 = arith.constant 0 : index
    %81 = vector.load %arg7[%c0_35, %c3, %c0_36, %c0_37] : memref<1x4x8x8xf32, #tpu.memory_space<vmem>>, vector<1x1x8x8xf32>
    %82 = vector.shape_cast %81 : vector<1x1x8x8xf32> to vector<8x8xf32>
    %83 = vector.shape_cast %80 : vector<8x8xf32> to vector<1x1x8x8xf32>
    tpu.vector_store %arg7[%c0_35, %c3, %c0_36, %c0_37], %83 {strides = array<i32>} : memref<1x4x8x8xf32, #tpu.memory_space<vmem>>, vector<1x1x8x8xf32>,
    %cst_38 = arith.constant 0.353553385 : f32
    %84 = vector.broadcast %cst_38 : f32 to vector<8x8xf32>
    %85 = arith.mulf %80, %84 : vector<8x8xf32>
    %cst_39 = arith.constant dense<0xFF800000> : vector<8xf32>
    %86 = vector.multi_reduction <maximumf>, %85, %cst_39 [1] : vector<8x8xf32> to vector<8xf32>
    %87 = vector.shape_cast %86 : vector<8xf32> to vector<8x1xf32>
    %88 = vector.broadcast %87 : vector<8x1xf32> to vector<8x8xf32>
    %89 = arith.subf %85, %88 : vector<8x8xf32>
    %90 = math.exp %89 : vector<8x8xf32>
    %cst_40 = arith.constant dense<0.000000e+00> : vector<8xf32>
    %91 = vector.multi_reduction <add>, %90, %cst_40 [1] : vector<8x8xf32> to vector<8xf32>
    %92 = vector.shape_cast %91 : vector<8xf32> to vector<8x1xf32>
    %93 = tpu.reciprocal %92 {approx = true} : vector<8x1xf32> -> vector<8x1xf32>
    %94 = vector.broadcast %93 : vector<8x1xf32> to vector<8x8xf32>
    %95 = arith.mulf %90, %94 : vector<8x8xf32>
    %cst_41 = arith.constant dense<0.000000e+00> : vector<8x8xf32>
    %96 = tpu.matmul %95, %78, %cst_41 {dimension_numbers = #tpu.dot_dimension_numbers<[1], [0], [0], [1], [0, 0, 1, 1], [], []>} : vector<8x8xf32>, vector<8x8xf32>, vector<8x8xf32> -> vector<8x8xf32>
    %97 = tpu.concatenate %33, %54, %75, %96 in 1 : vector<8x8xf32>, vector<8x8xf32>, vector<8x8xf32>, vector<8x8xf32> -> vector<8x32xf32>
    %c0_42 = arith.constant 0 : index
    %c0_43 = arith.constant 0 : index
    %c0_44 = arith.constant 0 : index
    %98 = vector.load %arg6[%c0_42, %c0_43, %c0_44] : memref<1x8x32xf32, #tpu.memory_space<vmem>>, vector<1x8x32xf32>
    %99 = vector.shape_cast %98 : vector<1x8x32xf32> to vector<8x32xf32>
    %100 = vector.shape_cast %97 : vector<8x32xf32> to vector<1x8x32xf32>
    tpu.vector_store %arg6[%c0_42, %c0_43, %c0_44], %100 {strides = array<i32>} : memref<1x8x32xf32, #tpu.memory_space<vmem>>, vector<1x8x32xf32>,
    return
  }
  func.func @transform_0(%arg0: i32, %arg1: i32) -> (i32, i32, i32) {
    %c0_i32 = arith.constant 0 : i32
    %c0_i32_0 = arith.constant 0 : i32
    %c0_i32_1 = arith.constant 0 : i32
    return %arg0, %c0_i32, %c0_i32_0 : i32, i32, i32
  }
  func.func @transform_1(%arg0: i32, %arg1: i32) -> (i32, i32, i32) {
    %c0_i32 = arith.constant 0 : i32
    %c0_i32_0 = arith.constant 0 : i32
    %c0_i32_1 = arith.constant 0 : i32
    %c0_i32_2 = arith.constant 0 : i32
    return %c0_i32, %c0_i32_0, %c0_i32_1 : i32, i32, i32
  }
  func.func @transform_2(%arg0: i32, %arg1: i32) -> (i32, i32, i32) {
    %c0_i32 = arith.constant 0 : i32
    %c0_i32_0 = arith.constant 0 : i32
    %c0_i32_1 = arith.constant 0 : i32
    %c0_i32_2 = arith.constant 0 : i32
    return %c0_i32, %c0_i32_0, %c0_i32_1 : i32, i32, i32
  }
  func.func @transform_3(%arg0: i32, %arg1: i32) -> (i32, i32, i32) {
    %c0_i32 = arith.constant 0 : i32
    %c0_i32_0 = arith.constant 0 : i32
    %c0_i32_1 = arith.constant 0 : i32
    return %arg0, %c0_i32, %c0_i32_0 : i32, i32, i32
  }
  func.func @transform_4(%arg0: i32, %arg1: i32) -> (i32, i32, i32) {
    %c0_i32 = arith.constant 0 : i32
    %c0_i32_0 = arith.constant 0 : i32
    return %arg0, %c0_i32, %arg1 : i32, i32, i32
  }
  func.func @transform_5(%arg0: i32, %arg1: i32) -> (i32, i32, i32, i32) {
    %c0_i32 = arith.constant 0 : i32
    %c0_i32_0 = arith.constant 0 : i32
    %c0_i32_1 = arith.constant 0 : i32
    return %arg0, %arg1, %c0_i32, %c0_i32_0 : i32, i32, i32, i32
  }
}

</mosaic_0001>

<llo_original>
// kernel: tpu_custom_call.1
$region0: #{tpu_custom_call.1}
  #allocation0 [shape = 'u32[]', space=smem, size = 0x4, offset = 0x4, fixed_abs, tag = 'smem constant byte address 0x4 - core index']
  #allocation1 [shape = 'u32[72,128]{1,0:T(1,128)}', space=vmem, size = 0x9000, scoped, tag = 'internal scratch']
  %s0 = inlined_call_operand.hbm [shape: f32[2,8,32], index: 0, kind: input, shape index: {}]
  %s1 = inlined_call_operand.hbm [shape: f32[1,32,96], index: 1, kind: input, shape index: {}]
  %s2 = inlined_call_operand.vmem [shape: f32[1,1,96], index: 2, kind: input, shape index: {}]
  %s3 = inlined_call_operand.hbm [shape: f32[2,8,8], index: 3, kind: input, shape index: {}]
  %s4 = inlined_call_operand.hbm [shape: f32[2,8,32], index: 4, kind: output, shape index: {0}]
  %s5 = inlined_call_operand.hbm [shape: f32[2,4,8,8], index: 5, kind: output, shape index: {1}]
  %6 = xla_tuple %s4, %s5
  %s7 = sld [smem:[#allocation0]]
  $region69: #{tpu_custom_call.1} parent=0
    _
  %s9 = ssub.s32 1, %s7
  %s10 = scalar_select 0, %s9, %s7
  $region1: #{tpu_custom_call.1} parent=0
    #allocation2 [shape = 'u8[8192]{0}', space=vmem, size = 0x2000, scoped, tag = 'input window, operand 0']
    #allocation3 [shape = 's32[2]{0}', space=sflag, size = 0x8, scoped, tag = 'scoped memory for tpu_custom_call.1']
    #allocation4 [shape = 's32[2]{0}', space=sflag, size = 0x8, scoped, tag = 'scoped memory for tpu_custom_call.1']
    #allocation5 [shape = 'u8[16384]{0}', space=vmem, size = 0x4000, scoped, tag = 'input window, operand 1, single buffered']
    #allocation6 [shape = 's32[1]{0}', space=sflag, size = 0x4, scoped, tag = 'scoped memory for tpu_custom_call.1']
    #allocation7 [shape = 'u8[8192]{0}', space=vmem, size = 0x2000, scoped, tag = 'input window, operand 3']
    #allocation8 [shape = 'u8[8192]{0}', space=vmem, size = 0x2000, scoped, tag = 'output window, operand 0']
    #allocation9 [shape = 'u8[32768]{0}', space=vmem, size = 0x8000, scoped, tag = 'output window, operand 1']
    #allocation10 [shape = 's32[2]{0}', space=sflag, size = 0x8, scoped, tag = 'scoped memory for tpu_custom_call.1']
    %11 = vsyncpa [#allocation3], 0
    %s12 = scalar_lea.sflag [#allocation3], 1
    %13 = vsyncpa %s12, 0
    %14 = vsyncpa [#allocation6], 0
    %15 = vsyncpa [#allocation4], 0
    %s16 = scalar_lea.sflag [#allocation4], 1
    %17 = vsyncpa %s16, 0
    %18 = vsyncpa [#allocation10], 0
    %s19 = scalar_lea.sflag [#allocation10], 1
    %20 = vsyncpa %s19, 0
    loop: start=0, step=1, limit=4
    $region2: #{tpu_custom_call.1} parent=1 // loop_pre_header
      _
    $region3: #{tpu_custom_call.1} parent=1 // loop_header
      %s22 = sphi 0, %s26
      %p23 = scmp.ge.s32.totalorder %s22, 4
      %s29 = sphi 0, %s41
      %s30 = sphi 0, %s37
      %s31 = sphi 0, %s29
      %s32 = sphi 0, %s30
      %s33 = sphi 0, %s31
      %s34 = sphi 0, %s32
      %s44 = sphi 0, %s46
      %s47 = sphi 0, %s44
      %s48 = sphi 0, %s47
      %s64 = sphi 0, %s48
      %s68 = sphi 0, %s68
      %s70 = sphi 0, %s68
      %s71 = sphi 0, %s70
      %s85 = sphi 0, %s71
      %s89 = sphi 0, %s89
      %s91 = sphi 0, %s89
      %s92 = sphi 0, %s91
      %s106 = sphi 0, %s92
      %s112 = sphi 0, %s114
      %s115 = sphi 0, %s112
      %s116 = sphi 0, %s115
      %s132 = sphi 0, %s116
      %s140 = sphi 0, %s142
      %s143 = sphi 0, %s140
      %s144 = sphi 0, %s143
      %s160 = sphi 0, %s144
      %s168 = sphi 0, %s170
      %s171 = sphi 0, %s168
      %s172 = sphi 0, %s171
      %s188 = sphi 0, %s172
    $region4: #{tpu_custom_call.1} parent=1 // loop_header_branch
      %25 = sbr.rel (%p23) target = $region8
    $region5: #{tpu_custom_call.1} parent=1 // loop_body
      %s27 = ssub.s32 %s22, 1
      %s28 = ssub.s32 %s22, 2
      %s35 = sadd.s32 1, %s30
      %p36 = scmp.ge.s32.totalorder %s35, 1
      %s37 = scalar_select %p36, 0, %s35
      %s38 = sadd.s32 1, %s29
      %s39 = scalar_select %p36, %s38, %s29
      %p40 = scmp.ge.s32.totalorder %s39, 2
      %s41 = scalar_select %p40, 0, %s39
      %s42 = ssub.s32 %s29, %s41
      %p43 = scmp.eq.s32.totalorder %s42, 0
      %s45 = sadd.s32 %s44, 1
      %s46 = scalar_select %p43, %s44, %s45
      %p49 = pneg %p43
      %p50 = scmp.eq.s32.totalorder %s22, 1
      %p51 = por %p49, %p50
      %p52 = scmp.ne.s32.totalorder %s44, %s47
      %p53 = scmp.eq.s32.totalorder %s22, 0
      %p54 = por %p52, %p53
      %p55 = scmp.ne.s32.totalorder %s44, %s47
      %p56 = scmp.eq.s32.totalorder %s27, 1
      %p57 = por %p55, %p56
      %p58 = scmp.ne.s32.totalorder %s47, %s48
      %p59 = scmp.eq.s32.totalorder %s27, 0
      %p60 = por %p58, %p59
      %p61 = scmp.ne.s32.totalorder %s47, %s48
      %p62 = scmp.eq.s32.totalorder %s28, 1
      %p63 = por %p61, %p62
      %p65 = scmp.ne.s32.totalorder %s48, %s64
      %p66 = scmp.eq.s32.totalorder %s28, 0
      %p67 = por %p65, %p66
      %s69 = sadd.s32 %s68, 1
      %p72 = scmp.eq.s32.totalorder %s22, 1
      %p73 = scmp.ne.s32.totalorder %s68, %s70
      %p74 = scmp.eq.s32.totalorder %s22, 0
      %p75 = por %p73, %p74
      %p76 = scmp.ne.s32.totalorder %s68, %s70
      %p77 = scmp.eq.s32.totalorder %s27, 1
      %p78 = por %p76, %p77
      %p79 = scmp.ne.s32.totalorder %s70, %s71
      %p80 = scmp.eq.s32.totalorder %s27, 0
      %p81 = por %p79, %p80
      %p82 = scmp.ne.s32.totalorder %s70, %s71
      %p83 = scmp.eq.s32.totalorder %s28, 1
      %p84 = por %p82, %p83
      %p86 = scmp.ne.s32.totalorder %s71, %s85
      %p87 = scmp.eq.s32.totalorder %s28, 0
      %p88 = por %p86, %p87
      %s90 = sadd.s32 %s89, 1
      %p93 = scmp.eq.s32.totalorder %s22, 1
      %p94 = scmp.ne.s32.totalorder %s89, %s91
      %p95 = scmp.eq.s32.totalorder %s22, 0
      %p96 = por %p94, %p95
      %p97 = scmp.ne.s32.totalorder %s89, %s91
      %p98 = scmp.eq.s32.totalorder %s27, 1
      %p99 = por %p97, %p98
      %p100 = scmp.ne.s32.totalorder %s91, %s92
      %p101 = scmp.eq.s32.totalorder %s27, 0
      %p102 = por %p100, %p101
      %p103 = scmp.ne.s32.totalorder %s91, %s92
      %p104 = scmp.eq.s32.totalorder %s28, 1
      %p105 = por %p103, %p104
      %p107 = scmp.ne.s32.totalorder %s92, %s106
      %p108 = scmp.eq.s32.totalorder %s28, 0
      %p109 = por %p107, %p108
      %s110 = ssub.s32 %s29, %s41
      %p111 = scmp.eq.s32.totalorder %s110, 0
      %s113 = sadd.s32 %s112, 1
      %s114 = scalar_select %p111, %s112, %s113
      %p117 = pneg %p111
      %p118 = scmp.eq.s32.totalorder %s22, 1
      %p119 = por %p117, %p118
      %p120 = scmp.ne.s32.totalorder %s112, %s115
      %p121 = scmp.eq.s32.totalorder %s22, 0
      %p122 = por %p120, %p121
      %p123 = scmp.ne.s32.totalorder %s112, %s115
      %p124 = scmp.eq.s32.totalorder %s27, 1
      %p125 = por %p123, %p124
      %p126 = scmp.ne.s32.totalorder %s115, %s116
      %p127 = scmp.eq.s32.totalorder %s27, 0
      %p128 = por %p126, %p127
      %p129 = scmp.ne.s32.totalorder %s115, %s116
      %p130 = scmp.eq.s32.totalorder %s28, 1
      %p131 = por %p129, %p130
      %p133 = scmp.ne.s32.totalorder %s116, %s132
      %p134 = scmp.eq.s32.totalorder %s28, 0
      %p135 = por %p133, %p134
      %s136 = ssub.s32 %s29, %s41
      %s137 = ssub.s32 %s30, %s37
      %s138 = sor.u32 %s136, %s137
      %p139 = scmp.eq.s32.totalorder %s138, 0
      %s141 = sadd.s32 %s140, 1
      %s142 = scalar_select %p139, %s140, %s141
      %p145 = pneg %p139
      %p146 = scmp.eq.s32.totalorder %s22, 1
      %p147 = por %p145, %p146
      %p148 = scmp.ne.s32.totalorder %s140, %s143
      %p149 = scmp.eq.s32.totalorder %s22, 0
      %p150 = por %p148, %p149
      %p151 = scmp.ne.s32.totalorder %s140, %s143
      %p152 = scmp.eq.s32.totalorder %s27, 1
      %p153 = por %p151, %p152
      %p154 = scmp.ne.s32.totalorder %s143, %s144
      %p155 = scmp.eq.s32.totalorder %s27, 0
      %p156 = por %p154, %p155
      %p157 = scmp.ne.s32.totalorder %s143, %s144
      %p158 = scmp.eq.s32.totalorder %s28, 1
      %p159 = por %p157, %p158
      %p161 = scmp.ne.s32.totalorder %s144, %s160
      %p162 = scmp.eq.s32.totalorder %s28, 0
      %p163 = por %p161, %p162
      %s164 = ssub.s32 %s29, %s41
      %s165 = ssub.s32 %s30, %s37
      %s166 = sor.u32 %s164, %s165
      %p167 = scmp.eq.s32.totalorder %s166, 0
      %s169 = sadd.s32 %s168, 1
      %s170 = scalar_select %p167, %s168, %s169
      %p173 = pneg %p167
      %p174 = scmp.eq.s32.totalorder %s22, 1
      %p175 = por %p173, %p174
      %p176 = scmp.ne.s32.totalorder %s168, %s171
      %p177 = scmp.eq.s32.totalorder %s22, 0
      %p178 = por %p176, %p177
      %p179 = scmp.ne.s32.totalorder %s168, %s171
      %p180 = scmp.eq.s32.totalorder %s27, 1
      %p181 = por %p179, %p180
      %p182 = scmp.ne.s32.totalorder %s171, %s172
      %p183 = scmp.eq.s32.totalorder %s27, 0
      %p184 = por %p182, %p183
      %p185 = scmp.ne.s32.totalorder %s171, %s172
      %p186 = scmp.eq.s32.totalorder %s28, 1
      %p187 = por %p185, %p186
      %p189 = scmp.ne.s32.totalorder %s172, %s188
      %p190 = scmp.eq.s32.totalorder %s28, 0
      %p191 = por %p189, %p190
      %p192 = scmp.le.s32.totalorder 1, %s22
      %p193 = scmp.lt.s32.totalorder %s22, 3
      %p194 = pnand %p192, %p193
      %p195 = pneg %p194
      // Predicated region
      $region9: #{tpu_custom_call.1} parent=5 // pred_check
        _
      $region10: #{tpu_custom_call.1} parent=5 // pred_check_branch
        %197 = sbr.rel (%p194) target = $region12
      $region11: #{tpu_custom_call.1} parent=5 // pred_region
        %s198 = ssub.s32 %s22, 1
        // Predicated region
        $region13: #{tpu_custom_call.1} parent=11 // pred_check
          %p199 = pneg %p81
        $region14: #{tpu_custom_call.1} parent=11 // pred_check_branch
          %201 = sbr.rel (%p199) target = $region16
        $region15: #{tpu_custom_call.1} parent=11 // pred_region
          %203 = vsyncadd [#allocation6], 0
          %s204 = sshll.u32 %s1, 4
          %s205 = int_to_ptr.hbm [resolvable:$true] %s204
          %s206 = sshll.u32 [#allocation5], 4
          %s207 = int_to_ptr.vmem [resolvable:$true] %s206
          %212 = dma.hbm_to_vmem [thread:$0]  %s205, 512, %s207, [#allocation6], 128, 128, 8
        $region16: #{tpu_custom_call.1} parent=11 // pred_fallthru
          _
        // Predicated region
        $region17: #{tpu_custom_call.1} parent=11 // pred_check
          %p213 = pneg %p102
        $region18: #{tpu_custom_call.1} parent=11 // pred_check_branch
          %215 = sbr.rel (%p213) target = $region20
        $region19: #{tpu_custom_call.1} parent=11 // pred_region
          _
        $region20: #{tpu_custom_call.1} parent=11 // pred_fallthru
          _
      $region12: #{tpu_custom_call.1} parent=5 // pred_fallthru
        _
      %p216 = scmp.lt.s32.totalorder %s22, 2
      // Predicated region
      $region21: #{tpu_custom_call.1} parent=5 // pred_check
        %p217 = pneg %p216
      $region22: #{tpu_custom_call.1} parent=5 // pred_check_branch
        %219 = sbr.rel (%p217) target = $region24
      $region23: #{tpu_custom_call.1} parent=5 // pred_region
        // Predicated region
        $region25: #{tpu_custom_call.1} parent=23 // pred_check
          %p220 = pneg %p54
        $region26: #{tpu_custom_call.1} parent=23 // pred_check_branch
          %222 = sbr.rel (%p220) target = $region28
        $region27: #{tpu_custom_call.1} parent=23 // pred_region
          %s223 = sand.u32 %s22, 1
          %s224 = scalar_lea.sflag [#allocation3], %s223
          %s225 = sand.u32 %s44, 1
          %s226 = smul.addr %s225, 8
          %s227 = scalar_lea.vmem [#allocation2], %s226
          %229 = vsyncadd %s224, 0
          %s230 = smul.addr %s29, 8
          %s231 = scalar_lea.hbm %s0, %s230
          %s233 = sshll.u32 %s231, 4
          %s234 = int_to_ptr.hbm [resolvable:$true] %s233
          %s235 = sshll.u32 %s227, 4
          %s236 = int_to_ptr.vmem [resolvable:$true] %s235
          %238 = dma.hbm_to_vmem [thread:$0]  %s234, 128, %s236, %s224
        $region28: #{tpu_custom_call.1} parent=23 // pred_fallthru
          _
        // Predicated region
        $region29: #{tpu_custom_call.1} parent=23 // pred_check
          %p239 = pneg %p122
        $region30: #{tpu_custom_call.1} parent=23 // pred_check_branch
          %241 = sbr.rel (%p239) target = $region32
        $region31: #{tpu_custom_call.1} parent=23 // pred_region
          %s242 = sand.u32 %s22, 1
          %s243 = scalar_lea.sflag [#allocation3], %s242
          %s244 = sand.u32 %s112, 1
          %s245 = smul.addr %s244, 8
          %s246 = scalar_lea.vmem [#allocation7], %s245
          %248 = vsyncadd %s243, 0
          %s249 = smul.addr %s29, 8
          %s250 = scalar_lea.hbm %s3, %s249
          %s252 = sshll.u32 %s250, 4
          %s253 = int_to_ptr.hbm [resolvable:$true] %s252
          %s254 = sshll.u32 %s246, 4
          %s255 = int_to_ptr.vmem [resolvable:$true] %s254
          %257 = dma.hbm_to_vmem [thread:$0]  %s253, 128, %s255, %s243
        $region32: #{tpu_custom_call.1} parent=23 // pred_fallthru
          _
      $region24: #{tpu_custom_call.1} parent=5 // pred_fallthru
        _
      %p258 = scmp.le.s32.totalorder 1, %s22
      %p259 = scmp.lt.s32.totalorder %s22, 3
      %p260 = pnand %p258, %p259
      %p261 = pneg %p260
      // Predicated region
      $region33: #{tpu_custom_call.1} parent=5 // pred_check
        _
      $region34: #{tpu_custom_call.1} parent=5 // pred_check_branch
        %263 = sbr.rel (%p260) target = $region36
      $region35: #{tpu_custom_call.1} parent=5 // pred_region
        %s264 = ssub.s32 %s22, 1
        %s265 = sand.u32 %s27, 1
        %s266 = scalar_lea.sflag [#allocation3], %s265
        %s267 = sand.u32 %s47, 1
        %s268 = smul.addr %s267, 8
        %s269 = scalar_lea.vmem [#allocation2], %s268
        // Predicated region
        $region37: #{tpu_custom_call.1} parent=35 // pred_check
          %p270 = pneg %p60
        $region38: #{tpu_custom_call.1} parent=35 // pred_check_branch
          %272 = sbr.rel (%p270) target = $region40
        $region39: #{tpu_custom_call.1} parent=35 // pred_region
          %274 = dma.done %s266, 128
        $region40: #{tpu_custom_call.1} parent=35 // pred_fallthru
          _
        // Predicated region
        $region41: #{tpu_custom_call.1} parent=35 // pred_check
          %p275 = pneg %p81
        $region42: #{tpu_custom_call.1} parent=35 // pred_check_branch
          %277 = sbr.rel (%p275) target = $region44
        $region43: #{tpu_custom_call.1} parent=35 // pred_region
          %279 = dma.done [#allocation6], 512
        $region44: #{tpu_custom_call.1} parent=35 // pred_fallthru
          _
        %s280 = sand.u32 %s27, 1
        %s281 = scalar_lea.sflag [#allocation3], %s280
        %s282 = sand.u32 %s115, 1
        %s283 = smul.addr %s282, 8
        %s284 = scalar_lea.vmem [#allocation7], %s283
        // Predicated region
        $region45: #{tpu_custom_call.1} parent=35 // pred_check
          %p285 = pneg %p128
        $region46: #{tpu_custom_call.1} parent=35 // pred_check_branch
          %287 = sbr.rel (%p285) target = $region48
        $region47: #{tpu_custom_call.1} parent=35 // pred_region
          %289 = dma.done %s281, 128
        $region48: #{tpu_custom_call.1} parent=35 // pred_fallthru
          _
        %s290 = sand.u32 %s27, 1
        %s291 = scalar_lea.sflag [#allocation3], %s290
        %s292 = sand.u32 %s47, 1
        %s293 = smul.addr %s292, 8
        %s294 = scalar_lea.vmem [#allocation2], %s293
        %p295 = pneg %p60
        %p296 = pneg %p57
        %p297 = pneg %p81
        %p298 = pneg %p78
        %p299 = pneg %p102
        %p300 = pneg %p99
        %s301 = sand.u32 %s27, 1
        %s302 = scalar_lea.sflag [#allocation3], %s301
        %s303 = sand.u32 %s115, 1
        %s304 = smul.addr %s303, 8
        %s305 = scalar_lea.vmem [#allocation7], %s304
        %p306 = pneg %p128
        %p307 = pneg %p125
        %p308 = pneg %p156
        %p309 = pneg %p153
        %s310 = sand.u32 %s143, 1
        %s311 = scalar_lea.sflag [#allocation4], %s310
        %s312 = sand.u32 %s143, 1
        %s313 = smul.addr %s312, 8
        %s314 = scalar_lea.vmem [#allocation8], %s313
        %p315 = pneg %p184
        %p316 = pneg %p181
        %s317 = sand.u32 %s171, 1
        %s318 = scalar_lea.sflag [#allocation10], %s317
        %s319 = sand.u32 %s171, 1
        %s320 = smul.addr %s319, 32
        %s321 = scalar_lea.vmem [#allocation9], %s320
        %s322 = smul.u32 4, %s32
        %v323 = vld [vmem:[%s269] sm:$0xff]
        %s324 = smul.u32 %s32, 32
        %s325 = scalar_lea.vmem [#allocation5], %s324
        %v326 = vld [vmem:[%s325] sm:$0xff]
        %v327 = vld [vmem:[%s325 + $0x8] sm:$0xff]
        %v328 = vld [vmem:[%s325 + $0x10] sm:$0xff]
        %v329 = vld [vmem:[%s325 + $0x18] sm:$0xff]
        %s330 = scalar_lea.vmem %s2, %s32
        %v331 = vld [vmem:[%s330] sm:$0x1]
        %v333 = vperm.slane %v331, 0
        %vm335 = vcmask 261120
        %v337 = vsel %vm335, %v323, 0
        %339 = vmatpush.msra.mxu0 0.0
        %340 = vmatpush.msra.mxu0 0.0
        %341 = vmatpush.msra.mxu0 0.0
        %342 = vmatpush.msra.mxu0 0.0
        %343 = vmatpush.msra.mxu0 0.0
        %344 = vmatpush.msra.mxu0 0.0
        %345 = vmatpush.msra.mxu0 0.0
        %346 = vmatpush.msra.mxu0 0.0
        %347 = vmatpush.msra.mxu0 0.0
        %348 = vmatpush.msra.mxu0 0.0
        %349 = vmatpush.msra.mxu0 0.0
        %350 = vmatpush.msra.mxu0 0.0
        %351 = vmatpush.msra.mxu0 %v329
        %352 = vmatpush.msra.mxu0 %v328
        %353 = vmatpush.msra.mxu0 %v327
        %354 = vmatpush.msra.mxu0 %v326
        %355 = vmatmul.f32.gmra.mxu0 %v337
        %v356 = vpop.f32.mrf.mxu0
        %v357 = vadd.f32 %v333, %v356
        %358 = vdwg.mxu0
        %v359 = vld [vmem:[%s284] sm:$0xff]
        %361 = vrot.lane.b32.xlu0 %v357, 96
        %v362 = vpop.permute.xlu0 %361
        %vm363 = vcmask 64512
        %v364 = vsel %vm363, %v357, 0
        %v366 = vsel %vm363, %v362, 0
        %368 = vmatpush.xpose.msra.mxu0 0.0
        %369 = vmatpush.xpose.msra.mxu0 0.0
        %370 = vmatpush.xpose.msra.mxu0 0.0
        %371 = vmatpush.xpose.msra.mxu0 0.0
        %372 = vmatpush.xpose.msra.mxu0 0.0
        %373 = vmatpush.xpose.msra.mxu0 0.0
        %374 = vmatpush.xpose.msra.mxu0 0.0
        %375 = vmatpush.xpose.msra.mxu0 0.0
        %376 = vmatpush.xpose.msra.mxu0 0.0
        %377 = vmatpush.xpose.msra.mxu0 0.0
        %378 = vmatpush.xpose.msra.mxu0 0.0
        %379 = vmatpush.xpose.msra.mxu0 0.0
        %380 = vmatpush.xpose.msra.mxu0 0.0
        %381 = vmatpush.xpose.msra.mxu0 0.0
        %382 = vmatpush.xpose.msra.mxu0 0.0
        %383 = vmatpush.xpose.msra.mxu0 %v366
        %384 = vmatmul.f32.gmra.mxu0 %v364
        %v385 = vpop.f32.mrf.mxu0
        %v386 = vadd.f32 %v359, %v385
        %387 = vdwg.mxu0
        %388 = vst.msk [vmem:[%s321] sm:$0xff] %vm363, %v386
        %v389 = vmul.f32 %v386, 0.35355338
        %v390 = vsel %vm363, %v389, -inf
        %391 = vmax.xlane.f32.xlu0 %v390
        %v392 = vpop.xlane.xlu0 %391
        %v393 = vsub.f32 %v389, %v392
        %v394 = vmul.f32 %v393, 1.442695
        %v395 = vpow.pop %v394
        %v396 = vsel %vm363, %v395, 0.0
        %397 = vadd.xlane.f32.xlu0 %v396
        %v398 = vpop.xlane.xlu0 %397
        %v399 = vrcp.pop %v398
        %v400 = vmul.f32 %v395, %v399
        %401 = vrot.lane.b32.xlu0 %v357, 64
        %v402 = vpop.permute.xlu0 %401
        %v405 = vsel %vm363, %v400, 0
        %407 = vmatpush.msra.mxu0 0.0
        %408 = vmatpush.msra.mxu0 0.0
        %409 = vmatpush.msra.mxu0 0.0
        %410 = vmatpush.msra.mxu0 0.0
        %411 = vmatpush.msra.mxu0 0.0
        %412 = vmatpush.msra.mxu0 0.0
        %413 = vmatpush.msra.mxu0 0.0
        %414 = vmatpush.msra.mxu0 0.0
        %415 = vmatpush.msra.mxu0 0.0
        %416 = vmatpush.msra.mxu0 0.0
        %417 = vmatpush.msra.mxu0 0.0
        %418 = vmatpush.msra.mxu0 0.0
        %419 = vmatpush.msra.mxu0 0.0
        %420 = vmatpush.msra.mxu0 0.0
        %421 = vmatpush.msra.mxu0 0.0
        %422 = vmatpush.msra.mxu0 %v402
        %423 = vmatmul.f32.gmra.mxu0 %v405
        %v424 = vpop.f32.mrf.mxu0
        %v425 = vadd.f32 0.0, %v424
        %426 = vdwg.mxu0
        %427 = vrot.lane.b32.xlu0 %v357, 120
        %v428 = vpop.permute.xlu0 %427
        %429 = vrot.lane.b32.xlu0 %v357, 88
        %v430 = vpop.permute.xlu0 %429
        %v431 = vsel %vm363, %v428, 0
        %v433 = vsel %vm363, %v430, 0
        %435 = vmatpush.xpose.msra.mxu0 0.0
        %436 = vmatpush.xpose.msra.mxu0 0.0
        %437 = vmatpush.xpose.msra.mxu0 0.0
        %438 = vmatpush.xpose.msra.mxu0 0.0
        %439 = vmatpush.xpose.msra.mxu0 0.0
        %440 = vmatpush.xpose.msra.mxu0 0.0
        %441 = vmatpush.xpose.msra.mxu0 0.0
        %442 = vmatpush.xpose.msra.mxu0 0.0
        %443 = vmatpush.xpose.msra.mxu0 0.0
        %444 = vmatpush.xpose.msra.mxu0 0.0
        %445 = vmatpush.xpose.msra.mxu0 0.0
        %446 = vmatpush.xpose.msra.mxu0 0.0
        %447 = vmatpush.xpose.msra.mxu0 0.0
        %448 = vmatpush.xpose.msra.mxu0 0.0
        %449 = vmatpush.xpose.msra.mxu0 0.0
        %450 = vmatpush.xpose.msra.mxu0 %v433
        %451 = vmatmul.f32.gmra.mxu0 %v431
        %v452 = vpop.f32.mrf.mxu0
        %v453 = vadd.f32 %v359, %v452
        %454 = vdwg.mxu0
        %s455 = scalar_lea.vmem %s321, 8 [#allocation9]
        %456 = vst.msk [vmem:[%s455] sm:$0xff] %vm363, %v453
        %v457 = vmul.f32 %v453, 0.35355338
        %v458 = vsel %vm363, %v457, -inf
        %459 = vmax.xlane.f32.xlu0 %v458
        %v460 = vpop.xlane.xlu0 %459
        %v461 = vsub.f32 %v457, %v460
        %v462 = vmul.f32 %v461, 1.442695
        %v463 = vpow.pop %v462
        %v464 = vsel %vm363, %v463, 0.0
        %465 = vadd.xlane.f32.xlu0 %v464
        %v466 = vpop.xlane.xlu0 %465
        %v467 = vrcp.pop %v466
        %v468 = vmul.f32 %v463, %v467
        %469 = vrot.lane.b32.xlu0 %v357, 56
        %v470 = vpop.permute.xlu0 %469
        %v473 = vsel %vm363, %v468, 0
        %475 = vmatpush.msra.mxu0 0.0
        %476 = vmatpush.msra.mxu0 0.0
        %477 = vmatpush.msra.mxu0 0.0
        %478 = vmatpush.msra.mxu0 0.0
        %479 = vmatpush.msra.mxu0 0.0
        %480 = vmatpush.msra.mxu0 0.0
        %481 = vmatpush.msra.mxu0 0.0
        %482 = vmatpush.msra.mxu0 0.0
        %483 = vmatpush.msra.mxu0 0.0
        %484 = vmatpush.msra.mxu0 0.0
        %485 = vmatpush.msra.mxu0 0.0
        %486 = vmatpush.msra.mxu0 0.0
        %487 = vmatpush.msra.mxu0 0.0
        %488 = vmatpush.msra.mxu0 0.0
        %489 = vmatpush.msra.mxu0 0.0
        %490 = vmatpush.msra.mxu0 %v470
        %491 = vmatmul.f32.gmra.mxu0 %v473
        %v492 = vpop.f32.mrf.mxu0
        %v493 = vadd.f32 0.0, %v492
        %494 = vdwg.mxu0
        %495 = vrot.lane.b32.xlu0 %v357, 112
        %v496 = vpop.permute.xlu0 %495
        %497 = vrot.lane.b32.xlu0 %v357, 80
        %v498 = vpop.permute.xlu0 %497
        %v499 = vsel %vm363, %v496, 0
        %v501 = vsel %vm363, %v498, 0
        %503 = vmatpush.xpose.msra.mxu0 0.0
        %504 = vmatpush.xpose.msra.mxu0 0.0
        %505 = vmatpush.xpose.msra.mxu0 0.0
        %506 = vmatpush.xpose.msra.mxu0 0.0
        %507 = vmatpush.xpose.msra.mxu0 0.0
        %508 = vmatpush.xpose.msra.mxu0 0.0
        %509 = vmatpush.xpose.msra.mxu0 0.0
        %510 = vmatpush.xpose.msra.mxu0 0.0
        %511 = vmatpush.xpose.msra.mxu0 0.0
        %512 = vmatpush.xpose.msra.mxu0 0.0
        %513 = vmatpush.xpose.msra.mxu0 0.0
        %514 = vmatpush.xpose.msra.mxu0 0.0
        %515 = vmatpush.xpose.msra.mxu0 0.0
        %516 = vmatpush.xpose.msra.mxu0 0.0
        %517 = vmatpush.xpose.msra.mxu0 0.0
        %518 = vmatpush.xpose.msra.mxu0 %v501
        %519 = vmatmul.f32.gmra.mxu0 %v499
        %v520 = vpop.f32.mrf.mxu0
        %v521 = vadd.f32 %v359, %v520
        %522 = vdwg.mxu0
        %s523 = scalar_lea.vmem %s321, 16 [#allocation9]
        %524 = vst.msk [vmem:[%s523] sm:$0xff] %vm363, %v521
        %v525 = vmul.f32 %v521, 0.35355338
        %v526 = vsel %vm363, %v525, -inf
        %527 = vmax.xlane.f32.xlu0 %v526
        %v528 = vpop.xlane.xlu0 %527
        %v529 = vsub.f32 %v525, %v528
        %v530 = vmul.f32 %v529, 1.442695
        %v531 = vpow.pop %v530
        %v532 = vsel %vm363, %v531, 0.0
        %533 = vadd.xlane.f32.xlu0 %v532
        %v534 = vpop.xlane.xlu0 %533
        %v535 = vrcp.pop %v534
        %v536 = vmul.f32 %v531, %v535
        %537 = vrot.lane.b32.xlu0 %v357, 48
        %v538 = vpop.permute.xlu0 %537
        %v541 = vsel %vm363, %v536, 0
        %543 = vmatpush.msra.mxu0 0.0
        %544 = vmatpush.msra.mxu0 0.0
        %545 = vmatpush.msra.mxu0 0.0
        %546 = vmatpush.msra.mxu0 0.0
        %547 = vmatpush.msra.mxu0 0.0
        %548 = vmatpush.msra.mxu0 0.0
        %549 = vmatpush.msra.mxu0 0.0
        %550 = vmatpush.msra.mxu0 0.0
        %551 = vmatpush.msra.mxu0 0.0
        %552 = vmatpush.msra.mxu0 0.0
        %553 = vmatpush.msra.mxu0 0.0
        %554 = vmatpush.msra.mxu0 0.0
        %555 = vmatpush.msra.mxu0 0.0
        %556 = vmatpush.msra.mxu0 0.0
        %557 = vmatpush.msra.mxu0 0.0
        %558 = vmatpush.msra.mxu0 %v538
        %559 = vmatmul.f32.gmra.mxu0 %v541
        %v560 = vpop.f32.mrf.mxu0
        %v561 = vadd.f32 0.0, %v560
        %562 = vdwg.mxu0
        %563 = vrot.lane.b32.xlu0 %v357, 104
        %v564 = vpop.permute.xlu0 %563
        %565 = vrot.lane.b32.xlu0 %v357, 72
        %v566 = vpop.permute.xlu0 %565
        %v567 = vsel %vm363, %v564, 0
        %v569 = vsel %vm363, %v566, 0
        %571 = vmatpush.xpose.msra.mxu0 0.0
        %572 = vmatpush.xpose.msra.mxu0 0.0
        %573 = vmatpush.xpose.msra.mxu0 0.0
        %574 = vmatpush.xpose.msra.mxu0 0.0
        %575 = vmatpush.xpose.msra.mxu0 0.0
        %576 = vmatpush.xpose.msra.mxu0 0.0
        %577 = vmatpush.xpose.msra.mxu0 0.0
        %578 = vmatpush.xpose.msra.mxu0 0.0
        %579 = vmatpush.xpose.msra.mxu0 0.0
        %580 = vmatpush.xpose.msra.mxu0 0.0
        %581 = vmatpush.xpose.msra.mxu0 0.0
        %582 = vmatpush.xpose.msra.mxu0 0.0
        %583 = vmatpush.xpose.msra.mxu0 0.0
        %584 = vmatpush.xpose.msra.mxu0 0.0
        %585 = vmatpush.xpose.msra.mxu0 0.0
        %586 = vmatpush.xpose.msra.mxu0 %v569
        %587 = vmatmul.f32.gmra.mxu0 %v567
        %v588 = vpop.f32.mrf.mxu0
        %v589 = vadd.f32 %v359, %v588
        %590 = vdwg.mxu0
        %s591 = scalar_lea.vmem %s321, 24 [#allocation9]
        %592 = vst.msk [vmem:[%s591] sm:$0xff] %vm363, %v589
        %v593 = vmul.f32 %v589, 0.35355338
        %v594 = vsel %vm363, %v593, -inf
        %595 = vmax.xlane.f32.xlu0 %v594
        %v596 = vpop.xlane.xlu0 %595
        %v597 = vsub.f32 %v593, %v596
        %v598 = vmul.f32 %v597, 1.442695
        %v599 = vpow.pop %v598
        %v600 = vsel %vm363, %v599, 0.0
        %601 = vadd.xlane.f32.xlu0 %v600
        %v602 = vpop.xlane.xlu0 %601
        %v603 = vrcp.pop %v602
        %v604 = vmul.f32 %v599, %v603
        %605 = vrot.lane.b32.xlu0 %v357, 40
        %v606 = vpop.permute.xlu0 %605
        %v609 = vsel %vm363, %v604, 0
        %611 = vmatpush.msra.mxu0 0.0
        %612 = vmatpush.msra.mxu0 0.0
        %613 = vmatpush.msra.mxu0 0.0
        %614 = vmatpush.msra.mxu0 0.0
        %615 = vmatpush.msra.mxu0 0.0
        %616 = vmatpush.msra.mxu0 0.0
        %617 = vmatpush.msra.mxu0 0.0
        %618 = vmatpush.msra.mxu0 0.0
        %619 = vmatpush.msra.mxu0 0.0
        %620 = vmatpush.msra.mxu0 0.0
        %621 = vmatpush.msra.mxu0 0.0
        %622 = vmatpush.msra.mxu0 0.0
        %623 = vmatpush.msra.mxu0 0.0
        %624 = vmatpush.msra.mxu0 0.0
        %625 = vmatpush.msra.mxu0 0.0
        %626 = vmatpush.msra.mxu0 %v606
        %627 = vmatmul.f32.gmra.mxu0 %v609
        %v628 = vpop.f32.mrf.mxu0
        %v629 = vadd.f32 0.0, %v628
        %630 = vdwg.mxu0
        %632 = vrot.lane.b32.xlu0 %v493, 8
        %v633 = vpop.permute.xlu0 %632
        %636 = vrot.lane.b32.xlu0 %v561, 16
        %v637 = vpop.permute.xlu0 %636
        %640 = vrot.lane.b32.xlu0 %v629, 24
        %v641 = vpop.permute.xlu0 %640
        %v643 = vsel %vm363, %v425, %v633
        %vm644 = vcmask 130048
        %v645 = vsel %vm644, %v643, %v637
        %vm646 = vcmask 195584
        %v647 = vsel %vm646, %v645, %v641
        %648 = vst.msk [vmem:[%s314] sm:$0xff] %vm335, %v647
        %s649 = sand.u32 %s143, 1
        %s650 = scalar_lea.sflag [#allocation4], %s649
        %s651 = sand.u32 %s143, 1
        %s652 = smul.addr %s651, 8
        %s653 = scalar_lea.vmem [#allocation8], %s652
        %s654 = sand.u32 %s171, 1
        %s655 = scalar_lea.sflag [#allocation10], %s654
        %s656 = sand.u32 %s171, 1
        %s657 = smul.addr %s656, 32
        %s658 = scalar_lea.vmem [#allocation9], %s657
        // Predicated region
        $region49: #{tpu_custom_call.1} parent=35 // pred_check
          %p659 = pneg %p153
        $region50: #{tpu_custom_call.1} parent=35 // pred_check_branch
          %661 = sbr.rel (%p659) target = $region52
        $region51: #{tpu_custom_call.1} parent=35 // pred_region
          %663 = vsyncadd %s650, 0
          %s664 = sadd.s32 %s32, %s31
          %s665 = smul.addr %s664, 8
          %s666 = scalar_lea.hbm %s4, %s665
          %s668 = sshll.u32 %s653, 4
          %s669 = int_to_ptr.vmem [resolvable:$true] %s668
          %s670 = sshll.u32 %s666, 4
          %s671 = int_to_ptr.hbm [resolvable:$true] %s670
          %673 = dma.vmem_to_hbm [thread:$0]  %s669, 128, %s671, %s650
        $region52: #{tpu_custom_call.1} parent=35 // pred_fallthru
          _
        // Predicated region
        $region53: #{tpu_custom_call.1} parent=35 // pred_check
          %p674 = pneg %p181
        $region54: #{tpu_custom_call.1} parent=35 // pred_check_branch
          %676 = sbr.rel (%p674) target = $region56
        $region55: #{tpu_custom_call.1} parent=35 // pred_region
          %s677 = smul.u32 4, %s32
          %679 = vsyncadd %s655, 0
          %s680 = smul.addr %s31, 4
          %s681 = sadd.s32 %s677, %s680
          %s682 = smul.addr %s681, 8
          %s683 = scalar_lea.hbm %s5, %s682
          %s684 = sshll.u32 %s658, 4
          %s685 = int_to_ptr.vmem [resolvable:$true] %s684
          %s686 = sshll.u32 %s683, 4
          %s687 = int_to_ptr.hbm [resolvable:$true] %s686
          %692 = dma.vmem_to_hbm [thread:$0]  %s685, 512, %s687, %s655, 128, 128, 8
        $region56: #{tpu_custom_call.1} parent=35 // pred_fallthru
          _
      $region36: #{tpu_custom_call.1} parent=5 // pred_fallthru
        _
      %p693 = scmp.le.s32.totalorder 2, %s22
      // Predicated region
      $region57: #{tpu_custom_call.1} parent=5 // pred_check
        %p694 = pneg %p693
      $region58: #{tpu_custom_call.1} parent=5 // pred_check_branch
        %696 = sbr.rel (%p694) target = $region60
      $region59: #{tpu_custom_call.1} parent=5 // pred_region
        %s697 = ssub.s32 %s22, 2
        // Predicated region
        $region61: #{tpu_custom_call.1} parent=59 // pred_check
          %p698 = pneg %p159
        $region62: #{tpu_custom_call.1} parent=59 // pred_check_branch
          %700 = sbr.rel (%p698) target = $region64
        $region63: #{tpu_custom_call.1} parent=59 // pred_region
          %s701 = sand.u32 %s144, 1
          %s702 = scalar_lea.sflag [#allocation4], %s701
          %s703 = sand.u32 %s144, 1
          %s704 = smul.addr %s703, 8
          %s705 = scalar_lea.vmem [#allocation8], %s704
          %707 = dma.done %s702, 128
        $region64: #{tpu_custom_call.1} parent=59 // pred_fallthru
          _
        // Predicated region
        $region65: #{tpu_custom_call.1} parent=59 // pred_check
          %p708 = pneg %p187
        $region66: #{tpu_custom_call.1} parent=59 // pred_check_branch
          %710 = sbr.rel (%p708) target = $region68
        $region67: #{tpu_custom_call.1} parent=59 // pred_region
          %s711 = sand.u32 %s172, 1
          %s712 = scalar_lea.sflag [#allocation10], %s711
          %s713 = sand.u32 %s172, 1
          %s714 = smul.addr %s713, 32
          %s715 = scalar_lea.vmem [#allocation9], %s714
          %717 = dma.done %s712, 512
        $region68: #{tpu_custom_call.1} parent=59 // pred_fallthru
          _
      $region60: #{tpu_custom_call.1} parent=5 // pred_fallthru
        _
    $region6: #{tpu_custom_call.1} parent=1 // loop_footer
      %s26 = sadd.s32 1, %s22
    $region7: #{tpu_custom_call.1} parent=1 // loop_footer_branch
      %21 = sbr.rel target = $region3
    $region8: #{tpu_custom_call.1} parent=1 // loop_exit
      _
    %718 = vsyncpa [#allocation3], 1
    %s719 = scalar_lea.sflag [#allocation3], 1
    %720 = vsyncpa %s719, 1
    %721 = vsyncpa [#allocation6], 1
    %722 = vsyncpa [#allocation4], 1
    %s723 = scalar_lea.sflag [#allocation4], 1
    %724 = vsyncpa %s723, 1
    %725 = vsyncpa [#allocation10], 1
    %s726 = scalar_lea.sflag [#allocation10], 1
    %727 = vsyncpa %s726, 1

// kernel: tpu_custom_call.1
$region0: #{tpu_custom_call.1}
  #allocation0 [shape = 'u32[]', space=smem, size = 0x4, offset = 0x4, fixed_abs, tag = 'smem constant byte address 0x4 - core index']
  #allocation1 [shape = 'u32[72,128]{1,0:T(1,128)}', space=vmem, size = 0x9000, scoped, tag = 'internal scratch']
  %s0 = inlined_call_operand.hbm [shape: f32[2,8,32], index: 0, kind: input, shape index: {}]
  %s1 = inlined_call_operand.hbm [shape: f32[1,32,96], index: 1, kind: input, shape index: {}]
  %s2 = inlined_call_operand.vmem [shape: f32[1,1,96], index: 2, kind: input, shape index: {}]
  %s3 = inlined_call_operand.hbm [shape: f32[2,8,8], index: 3, kind: input, shape index: {}]
  %s4 = inlined_call_operand.hbm [shape: f32[2,8,32], index: 4, kind: output, shape index: {0}]
  %s5 = inlined_call_operand.hbm [shape: f32[2,4,8,8], index: 5, kind: output, shape index: {1}]
  %6 = xla_tuple %s4, %s5
  %s7 = sld [smem:[#allocation0]]
  $region69: #{tpu_custom_call.1} parent=0
    _
  %s9 = ssub.s32 1, %s7
  %s10 = scalar_select 0, %s9, %s7
  $region1: #{tpu_custom_call.1} parent=0
    #allocation2 [shape = 'u8[8192]{0}', space=vmem, size = 0x2000, scoped, tag = 'input window, operand 0']
    #allocation3 [shape = 's32[2]{0}', space=sflag, size = 0x8, scoped, tag = 'scoped memory for tpu_custom_call.1']
    #allocation4 [shape = 's32[2]{0}', space=sflag, size = 0x8, scoped, tag = 'scoped memory for tpu_custom_call.1']
    #allocation5 [shape = 'u8[16384]{0}', space=vmem, size = 0x4000, scoped, tag = 'input window, operand 1, single buffered']
    #allocation6 [shape = 's32[1]{0}', space=sflag, size = 0x4, scoped, tag = 'scoped memory for tpu_custom_call.1']
    #allocation7 [shape = 'u8[8192]{0}', space=vmem, size = 0x2000, scoped, tag = 'input window, operand 3']
    #allocation8 [shape = 'u8[8192]{0}', space=vmem, size = 0x2000, scoped, tag = 'output window, operand 0']
    #allocation9 [shape = 'u8[32768]{0}', space=vmem, size = 0x8000, scoped, tag = 'output window, operand 1']
    #allocation10 [shape = 's32[2]{0}', space=sflag, size = 0x8, scoped, tag = 'scoped memory for tpu_custom_call.1']
    %11 = vsyncpa [#allocation3], 0
    %s12 = scalar_lea.sflag [#allocation3], 1
    %13 = vsyncpa %s12, 0
    %14 = vsyncpa [#allocation6], 0
    %15 = vsyncpa [#allocation4], 0
    %s16 = scalar_lea.sflag [#allocation4], 1
    %17 = vsyncpa %s16, 0
    %18 = vsyncpa [#allocation10], 0
    %s19 = scalar_lea.sflag [#allocation10], 1
    %20 = vsyncpa %s19, 0
    loop: start=0, step=1, limit=4
    $region2: #{tpu_custom_call.1} parent=1 // loop_pre_header
      _
    $region3: #{tpu_custom_call.1} parent=1 // loop_header
      %s22 = sphi 0, %s26
      %p23 = scmp.ge.s32.totalorder %s22, 4
      %s29 = sphi 0, %s41
      %s30 = sphi 0, %s37
      %s31 = sphi 0, %s29
      %s32 = sphi 0, %s30
      %s33 = sphi 0, %s31
      %s34 = sphi 0, %s32
      %s44 = sphi 0, %s46
      %s47 = sphi 0, %s44
      %s48 = sphi 0, %s47
      %s64 = sphi 0, %s48
      %s68 = sphi 0, %s68
      %s70 = sphi 0, %s68
      %s71 = sphi 0, %s70
      %s85 = sphi 0, %s71
      %s89 = sphi 0, %s89
      %s91 = sphi 0, %s89
      %s92 = sphi 0, %s91
      %s106 = sphi 0, %s92
      %s112 = sphi 0, %s114
      %s115 = sphi 0, %s112
      %s116 = sphi 0, %s115
      %s132 = sphi 0, %s116
      %s140 = sphi 0, %s142
      %s143 = sphi 0, %s140
      %s144 = sphi 0, %s143
      %s160 = sphi 0, %s144
      %s168 = sphi 0, %s170
      %s171 = sphi 0, %s168
      %s172 = sphi 0, %s171
      %s188 = sphi 0, %s172
    $region4: #{tpu_custom_call.1} parent=1 // loop_header_branch
      %25 = sbr.rel (%p23) target = $region8
    $region5: #{tpu_custom_call.1} parent=1 // loop_body
      %s27 = ssub.s32 %s22, 1
      %s28 = ssub.s32 %s22, 2
      %s35 = sadd.s32 1, %s30
      %p36 = scmp.ge.s32.totalorder %s35, 1
      %s37 = scalar_select %p36, 0, %s35
      %s38 = sadd.s32 1, %s29
      %s39 = scalar_select %p36, %s38, %s29
      %p40 = scmp.ge.s32.totalorder %s39, 2
      %s41 = scalar_select %p40, 0, %s39
      %s42 = ssub.s32 %s29, %s41
      %p43 = scmp.eq.s32.totalorder %s42, 0
      %s45 = sadd.s32 %s44, 1
      %s46 = scalar_select %p43, %s44, %s45
      %p49 = pneg %p43
      %p50 = scmp.eq.s32.totalorder %s22, 1
      %p51 = por %p49, %p50
      %p52 = scmp.ne.s32.totalorder %s44, %s47
      %p53 = scmp.eq.s32.totalorder %s22, 0
      %p54 = por %p52, %p53
      %p55 = scmp.ne.s32.totalorder %s44, %s47
      %p56 = scmp.eq.s32.totalorder %s27, 1
      %p57 = por %p55, %p56
      %p58 = scmp.ne.s32.totalorder %s47, %s48
      %p59 = scmp.eq.s32.totalorder %s27, 0
      %p60 = por %p58, %p59
      %p61 = scmp.ne.s32.totalorder %s47, %s48
      %p62 = scmp.eq.s32.totalorder %s28, 1
      %p63 = por %p61, %p62
      %p65 = scmp.ne.s32.totalorder %s48, %s64
      %p66 = scmp.eq.s32.totalorder %s28, 0
      %p67 = por %p65, %p66
      %s69 = sadd.s32 %s68, 1
      %p72 = scmp.eq.s32.totalorder %s22, 1
      %p73 = scmp.ne.s32.totalorder %s68, %s70
      %p74 = scmp.eq.s32.totalorder %s22, 0
      %p75 = por %p73, %p74
      %p76 = scmp.ne.s32.totalorder %s68, %s70
      %p77 = scmp.eq.s32.totalorder %s27, 1
      %p78 = por %p76, %p77
      %p79 = scmp.ne.s32.totalorder %s70, %s71
      %p80 = scmp.eq.s32.totalorder %s27, 0
      %p81 = por %p79, %p80
      %p82 = scmp.ne.s32.totalorder %s70, %s71
      %p83 = scmp.eq.s32.totalorder %s28, 1
      %p84 = por %p82, %p83
      %p86 = scmp.ne.s32.totalorder %s71, %s85
      %p87 = scmp.eq.s32.totalorder %s28, 0
      %p88 = por %p86, %p87
      %s90 = sadd.s32 %s89, 1
      %p93 = scmp.eq.s32.totalorder %s22, 1
      %p94 = scmp.ne.s32.totalorder %s89, %s91
      %p95 = scmp.eq.s32.totalorder %s22, 0
      %p96 = por %p94, %p95
      %p97 = scmp.ne.s32.totalorder %s89, %s91
      %p98 = scmp.eq.s32.totalorder %s27, 1
      %p99 = por %p97, %p98
      %p100 = scmp.ne.s32.totalorder %s91, %s92
      %p101 = scmp.eq.s32.totalorder %s27, 0
      %p102 = por %p100, %p101
      %p103 = scmp.ne.s32.totalorder %s91, %s92
      %p104 = scmp.eq.s32.totalorder %s28, 1
      %p105 = por %p103, %p104
      %p107 = scmp.ne.s32.totalorder %s92, %s106
      %p108 = scmp.eq.s32.totalorder %s28, 0
      %p109 = por %p107, %p108
      %s110 = ssub.s32 %s29, %s41
      %p111 = scmp.eq.s32.totalorder %s110, 0
      %s113 = sadd.s32 %s112, 1
      %s114 = scalar_select %p111, %s112, %s113
      %p117 = pneg %p111
      %p118 = scmp.eq.s32.totalorder %s22, 1
      %p119 = por %p117, %p118
      %p120 = scmp.ne.s32.totalorder %s112, %s115
      %p121 = scmp.eq.s32.totalorder %s22, 0
      %p122 = por %p120, %p121
      %p123 = scmp.ne.s32.totalorder %s112, %s115
      %p124 = scmp.eq.s32.totalorder %s27, 1
      %p125 = por %p123, %p124
      %p126 = scmp.ne.s32.totalorder %s115, %s116
      %p127 = scmp.eq.s32.totalorder %s27, 0
      %p128 = por %p126, %p127
      %p129 = scmp.ne.s32.totalorder %s115, %s116
      %p130 = scmp.eq.s32.totalorder %s28, 1
      %p131 = por %p129, %p130
      %p133 = scmp.ne.s32.totalorder %s116, %s132
      %p134 = scmp.eq.s32.totalorder %s28, 0
      %p135 = por %p133, %p134
      %s136 = ssub.s32 %s29, %s41
      %s137 = ssub.s32 %s30, %s37
      %s138 = sor.u32 %s136, %s137
      %p139 = scmp.eq.s32.totalorder %s138, 0
      %s141 = sadd.s32 %s140, 1
      %s142 = scalar_select %p139, %s140, %s141
      %p145 = pneg %p139
      %p146 = scmp.eq.s32.totalorder %s22, 1
      %p147 = por %p145, %p146
      %p148 = scmp.ne.s32.totalorder %s140, %s143
      %p149 = scmp.eq.s32.totalorder %s22, 0
      %p150 = por %p148, %p149
      %p151 = scmp.ne.s32.totalorder %s140, %s143
      %p152 = scmp.eq.s32.totalorder %s27, 1
      %p153 = por %p151, %p152
      %p154 = scmp.ne.s32.totalorder %s143, %s144
      %p155 = scmp.eq.s32.totalorder %s27, 0
      %p156 = por %p154, %p155
      %p157 = scmp.ne.s32.totalorder %s143, %s144
      %p158 = scmp.eq.s32.totalorder %s28, 1
      %p159 = por %p157, %p158
      %p161 = scmp.ne.s32.totalorder %s144, %s160
      %p162 = scmp.eq.s32.totalorder %s28, 0
      %p163 = por %p161, %p162
      %s164 = ssub.s32 %s29, %s41
      %s165 = ssub.s32 %s30, %s37
      %s166 = sor.u32 %s164, %s165
      %p167 = scmp.eq.s32.totalorder %s166, 0
      %s169 = sadd.s32 %s168, 1
      %s170 = scalar_select %p167, %s168, %s169
      %p173 = pneg %p167
      %p174 = scmp.eq.s32.totalorder %s22, 1
      %p175 = por %p173, %p174
      %p176 = scmp.ne.s32.totalorder %s168, %s171
      %p177 = scmp.eq.s32.totalorder %s22, 0
      %p178 = por %p176, %p177
      %p179 = scmp.ne.s32.totalorder %s168, %s171
      %p180 = scmp.eq.s32.totalorder %s27, 1
      %p181 = por %p179, %p180
      %p182 = scmp.ne.s32.totalorder %s171, %s172
      %p183 = scmp.eq.s32.totalorder %s27, 0
      %p184 = por %p182, %p183
      %p185 = scmp.ne.s32.totalorder %s171, %s172
      %p186 = scmp.eq.s32.totalorder %s28, 1
      %p187 = por %p185, %p186
      %p189 = scmp.ne.s32.totalorder %s172, %s188
      %p190 = scmp.eq.s32.totalorder %s28, 0
      %p191 = por %p189, %p190
      %p192 = scmp.le.s32.totalorder 1, %s22
      %p193 = scmp.lt.s32.totalorder %s22, 3
      %p194 = pnand %p192, %p193
      %p195 = pneg %p194
      // Predicated region
      $region9: #{tpu_custom_call.1} parent=5 // pred_check
        _
      $region10: #{tpu_custom_call.1} parent=5 // pred_check_branch
        %197 = sbr.rel (%p194) target = $region12
      $region11: #{tpu_custom_call.1} parent=5 // pred_region
        %s198 = ssub.s32 %s22, 1
        // Predicated region
        $region13: #{tpu_custom_call.1} parent=11 // pred_check
          %p199 = pneg %p81
        $region14: #{tpu_custom_call.1} parent=11 // pred_check_branch
          %201 = sbr.rel (%p199) target = $region16
        $region15: #{tpu_custom_call.1} parent=11 // pred_region
          %203 = vsyncadd [#allocation6], 0
          %s204 = sshll.u32 %s1, 4
          %s205 = int_to_ptr.hbm [resolvable:$true] %s204
          %s206 = sshll.u32 [#allocation5], 4
          %s207 = int_to_ptr.vmem [resolvable:$true] %s206
          %212 = dma.hbm_to_vmem [thread:$0]  %s205, 512, %s207, [#allocation6], 128, 128, 8
        $region16: #{tpu_custom_call.1} parent=11 // pred_fallthru
          _
        // Predicated region
        $region17: #{tpu_custom_call.1} parent=11 // pred_check
          %p213 = pneg %p102
        $region18: #{tpu_custom_call.1} parent=11 // pred_check_branch
          %215 = sbr.rel (%p213) target = $region20
        $region19: #{tpu_custom_call.1} parent=11 // pred_region
          _
        $region20: #{tpu_custom_call.1} parent=11 // pred_fallthru
          _
      $region12: #{tpu_custom_call.1} parent=5 // pred_fallthru
        _
      %p216 = scmp.lt.s32.totalorder %s22, 2
      // Predicated region
      $region21: #{tpu_custom_call.1} parent=5 // pred_check
        %p217 = pneg %p216
      $region22: #{tpu_custom_call.1} parent=5 // pred_check_branch
        %219 = sbr.rel (%p217) target = $region24
      $region23: #{tpu_custom_call.1} parent=5 // pred_region
        // Predicated region
        $region25: #{tpu_custom_call.1} parent=23 // pred_check
          %p220 = pneg %p54
        $region26: #{tpu_custom_call.1} parent=23 // pred_check_branch
          %222 = sbr.rel (%p220) target = $region28
        $region27: #{tpu_custom_call.1} parent=23 // pred_region
          %s223 = sand.u32 %s22, 1
          %s224 = scalar_lea.sflag [#allocation3], %s223
          %s225 = sand.u32 %s44, 1
          %s226 = smul.addr %s225, 8
          %s227 = scalar_lea.vmem [#allocation2], %s226
          %229 = vsyncadd %s224, 0
          %s230 = smul.addr %s29, 8
          %s231 = scalar_lea.hbm %s0, %s230
          %s233 = sshll.u32 %s231, 4
          %s234 = int_to_ptr.hbm [resolvable:$true] %s233
          %s235 = sshll.u32 %s227, 4
          %s236 = int_to_ptr.vmem [resolvable:$true] %s235
          %238 = dma.hbm_to_vmem [thread:$0]  %s234, 128, %s236, %s224
        $region28: #{tpu_custom_call.1} parent=23 // pred_fallthru
          _
        // Predicated region
        $region29: #{tpu_custom_call.1} parent=23 // pred_check
          %p239 = pneg %p122
        $region30: #{tpu_custom_call.1} parent=23 // pred_check_branch
          %241 = sbr.rel (%p239) target = $region32
        $region31: #{tpu_custom_call.1} parent=23 // pred_region
          %s242 = sand.u32 %s22, 1
          %s243 = scalar_lea.sflag [#allocation3], %s242
          %s244 = sand.u32 %s112, 1
          %s245 = smul.addr %s244, 8
          %s246 = scalar_lea.vmem [#allocation7], %s245
          %248 = vsyncadd %s243, 0
          %s249 = smul.addr %s29, 8
          %s250 = scalar_lea.hbm %s3, %s249
          %s252 = sshll.u32 %s250, 4
          %s253 = int_to_ptr.hbm [resolvable:$true] %s252
          %s254 = sshll.u32 %s246, 4
          %s255 = int_to_ptr.vmem [resolvable:$true] %s254
          %257 = dma.hbm_to_vmem [thread:$0]  %s253, 128, %s255, %s243
        $region32: #{tpu_custom_call.1} parent=23 // pred_fallthru
          _
      $region24: #{tpu_custom_call.1} parent=5 // pred_fallthru
        _
      %p258 = scmp.le.s32.totalorder 1, %s22
      %p259 = scmp.lt.s32.totalorder %s22, 3
      %p260 = pnand %p258, %p259
      %p261 = pneg %p260
      // Predicated region
      $region33: #{tpu_custom_call.1} parent=5 // pred_check
        _
      $region34: #{tpu_custom_call.1} parent=5 // pred_check_branch
        %263 = sbr.rel (%p260) target = $region36
      $region35: #{tpu_custom_call.1} parent=5 // pred_region
        %s264 = ssub.s32 %s22, 1
        %s265 = sand.u32 %s27, 1
        %s266 = scalar_lea.sflag [#allocation3], %s265
        %s267 = sand.u32 %s47, 1
        %s268 = smul.addr %s267, 8
        %s269 = scalar_lea.vmem [#allocation2], %s268
        // Predicated region
        $region37: #{tpu_custom_call.1} parent=35 // pred_check
          %p270 = pneg %p60
        $region38: #{tpu_custom_call.1} parent=35 // pred_check_branch
          %272 = sbr.rel (%p270) target = $region40
        $region39: #{tpu_custom_call.1} parent=35 // pred_region
          %274 = dma.done %s266, 128
        $region40: #{tpu_custom_call.1} parent=35 // pred_fallthru
          _
        // Predicated region
        $region41: #{tpu_custom_call.1} parent=35 // pred_check
          %p275 = pneg %p81
        $region42: #{tpu_custom_call.1} parent=35 // pred_check_branch
          %277 = sbr.rel (%p275) target = $region44
        $region43: #{tpu_custom_call.1} parent=35 // pred_region
          %279 = dma.done [#allocation6], 512
        $region44: #{tpu_custom_call.1} parent=35 // pred_fallthru
          _
        %s280 = sand.u32 %s27, 1
        %s281 = scalar_lea.sflag [#allocation3], %s280
        %s282 = sand.u32 %s115, 1
        %s283 = smul.addr %s282, 8
        %s284 = scalar_lea.vmem [#allocation7], %s283
        // Predicated region
        $region45: #{tpu_custom_call.1} parent=35 // pred_check
          %p285 = pneg %p128
        $region46: #{tpu_custom_call.1} parent=35 // pred_check_branch
          %287 = sbr.rel (%p285) target = $region48
        $region47: #{tpu_custom_call.1} parent=35 // pred_region
          %289 = dma.done %s281, 128
        $region48: #{tpu_custom_call.1} parent=35 // pred_fallthru
          _
        %s290 = sand.u32 %s27, 1
        %s291 = scalar_lea.sflag [#allocation3], %s290
        %s292 = sand.u32 %s47, 1
        %s293 = smul.addr %s292, 8
        %s294 = scalar_lea.vmem [#allocation2], %s293
        %p295 = pneg %p60
        %p296 = pneg %p57
        %p297 = pneg %p81
        %p298 = pneg %p78
        %p299 = pneg %p102
        %p300 = pneg %p99
        %s301 = sand.u32 %s27, 1
        %s302 = scalar_lea.sflag [#allocation3], %s301
        %s303 = sand.u32 %s115, 1
        %s304 = smul.addr %s303, 8
        %s305 = scalar_lea.vmem [#allocation7], %s304
        %p306 = pneg %p128
        %p307 = pneg %p125
        %p308 = pneg %p156
        %p309 = pneg %p153
        %s310 = sand.u32 %s143, 1
        %s311 = scalar_lea.sflag [#allocation4], %s310
        %s312 = sand.u32 %s143, 1
        %s313 = smul.addr %s312, 8
        %s314 = scalar_lea.vmem [#allocation8], %s313
        %p315 = pneg %p184
        %p316 = pneg %p181
        %s317 = sand.u32 %s171, 1
        %s318 = scalar_lea.sflag [#allocation10], %s317
        %s319 = sand.u32 %s171, 1
        %s320 = smul.addr %s319, 32
        %s321 = scalar_lea.vmem [#allocation9], %s320
        %s322 = smul.u32 4, %s32
        %v323 = vld [vmem:[%s269] sm:$0xff]
        %s324 = smul.u32 %s32, 32
        %s325 = scalar_lea.vmem [#allocation5], %s324
        %v326 = vld [vmem:[%s325] sm:$0xff]
        %v327 = vld [vmem:[%s325 + $0x8] sm:$0xff]
        %v328 = vld [vmem:[%s325 + $0x10] sm:$0xff]
        %v329 = vld [vmem:[%s325 + $0x18] sm:$0xff]
        %s330 = scalar_lea.vmem %s2, %s32
        %v331 = vld [vmem:[%s330] sm:$0x1]
        %v333 = vperm.slane %v331, 0
        %vm335 = vcmask 261120
        %v337 = vsel %vm335, %v323, 0
        %339 = vmatpush.msra.mxu0 0.0
        %340 = vmatpush.msra.mxu0 0.0
        %341 = vmatpush.msra.mxu0 0.0
        %342 = vmatpush.msra.mxu0 0.0
        %343 = vmatpush.msra.mxu0 0.0
        %344 = vmatpush.msra.mxu0 0.0
        %345 = vmatpush.msra.mxu0 0.0
        %346 = vmatpush.msra.mxu0 0.0
        %347 = vmatpush.msra.mxu0 0.0
        %348 = vmatpush.msra.mxu0 0.0
        %349 = vmatpush.msra.mxu0 0.0
        %350 = vmatpush.msra.mxu0 0.0
        %351 = vmatpush.msra.mxu0 %v329
        %352 = vmatpush.msra.mxu0 %v328
        %353 = vmatpush.msra.mxu0 %v327
        %354 = vmatpush.msra.mxu0 %v326
        %355 = vmatmul.f32.gmra.mxu0 %v337
        %v356 = vpop.f32.mrf.mxu0
        %v357 = vadd.f32 %v333, %v356
        %358 = vdwg.mxu0
        %v359 = vld [vmem:[%s284] sm:$0xff]
        %361 = vrot.lane.b32.xlu0 %v357, 96
        %v362 = vpop.permute.xlu0 %361
        %vm363 = vcmask 64512
        %v364 = vsel %vm363, %v357, 0
        %v366 = vsel %vm363, %v362, 0
        %368 = vmatpush.xpose.msra.mxu0 0.0
        %369 = vmatpush.xpose.msra.mxu0 0.0
        %370 = vmatpush.xpose.msra.mxu0 0.0
        %371 = vmatpush.xpose.msra.mxu0 0.0
        %372 = vmatpush.xpose.msra.mxu0 0.0
        %373 = vmatpush.xpose.msra.mxu0 0.0
        %374 = vmatpush.xpose.msra.mxu0 0.0
        %375 = vmatpush.xpose.msra.mxu0 0.0
        %376 = vmatpush.xpose.msra.mxu0 0.0
        %377 = vmatpush.xpose.msra.mxu0 0.0
        %378 = vmatpush.xpose.msra.mxu0 0.0
        %379 = vmatpush.xpose.msra.mxu0 0.0
        %380 = vmatpush.xpose.msra.mxu0 0.0
        %381 = vmatpush.xpose.msra.mxu0 0.0
        %382 = vmatpush.xpose.msra.mxu0 0.0
        %383 = vmatpush.xpose.msra.mxu0 %v366
        %384 = vmatmul.f32.gmra.mxu0 %v364
        %v385 = vpop.f32.mrf.mxu0
        %v386 = vadd.f32 %v359, %v385
        %387 = vdwg.mxu0
        %388 = vst.msk [vmem:[%s321] sm:$0xff] %vm363, %v386
        %v389 = vmul.f32 %v386, 0.35355338
        %v390 = vsel %vm363, %v389, -inf
        %391 = vmax.xlane.f32.xlu0 %v390
        %v392 = vpop.xlane.xlu0 %391
        %v393 = vsub.f32 %v389, %v392
        %v394 = vmul.f32 %v393, 1.442695
        %v395 = vpow.pop %v394
        %v396 = vsel %vm363, %v395, 0.0
        %397 = vadd.xlane.f32.xlu0 %v396
        %v398 = vpop.xlane.xlu0 %397
        %v399 = vrcp.pop %v398
        %v400 = vmul.f32 %v395, %v399
        %401 = vrot.lane.b32.xlu0 %v357, 64
        %v402 = vpop.permute.xlu0 %401
        %v405 = vsel %vm363, %v400, 0
        %407 = vmatpush.msra.mxu0 0.0
        %408 = vmatpush.msra.mxu0 0.0
        %409 = vmatpush.msra.mxu0 0.0
        %410 = vmatpush.msra.mxu0 0.0
        %411 = vmatpush.msra.mxu0 0.0
        %412 = vmatpush.msra.mxu0 0.0
        %413 = vmatpush.msra.mxu0 0.0
        %414 = vmatpush.msra.mxu0 0.0
        %415 = vmatpush.msra.mxu0 0.0
        %416 = vmatpush.msra.mxu0 0.0
        %417 = vmatpush.msra.mxu0 0.0
        %418 = vmatpush.msra.mxu0 0.0
        %419 = vmatpush.msra.mxu0 0.0
        %420 = vmatpush.msra.mxu0 0.0
        %421 = vmatpush.msra.mxu0 0.0
        %422 = vmatpush.msra.mxu0 %v402
        %423 = vmatmul.f32.gmra.mxu0 %v405
        %v424 = vpop.f32.mrf.mxu0
        %v425 = vadd.f32 0.0, %v424
        %426 = vdwg.mxu0
        %427 = vrot.lane.b32.xlu0 %v357, 120
        %v428 = vpop.permute.xlu0 %427
        %429 = vrot.lane.b32.xlu0 %v357, 88
        %v430 = vpop.permute.xlu0 %429
        %v431 = vsel %vm363, %v428, 0
        %v433 = vsel %vm363, %v430, 0
        %435 = vmatpush.xpose.msra.mxu0 0.0
        %436 = vmatpush.xpose.msra.mxu0 0.0
        %437 = vmatpush.xpose.msra.mxu0 0.0
        %438 = vmatpush.xpose.msra.mxu0 0.0
        %439 = vmatpush.xpose.msra.mxu0 0.0
        %440 = vmatpush.xpose.msra.mxu0 0.0
        %441 = vmatpush.xpose.msra.mxu0 0.0
        %442 = vmatpush.xpose.msra.mxu0 0.0
        %443 = vmatpush.xpose.msra.mxu0 0.0
        %444 = vmatpush.xpose.msra.mxu0 0.0
        %445 = vmatpush.xpose.msra.mxu0 0.0
        %446 = vmatpush.xpose.msra.mxu0 0.0
        %447 = vmatpush.xpose.msra.mxu0 0.0
        %448 = vmatpush.xpose.msra.mxu0 0.0
        %449 = vmatpush.xpose.msra.mxu0 0.0
        %450 = vmatpush.xpose.msra.mxu0 %v433
        %451 = vmatmul.f32.gmra.mxu0 %v431
        %v452 = vpop.f32.mrf.mxu0
        %v453 = vadd.f32 %v359, %v452
        %454 = vdwg.mxu0
        %s455 = scalar_lea.vmem %s321, 8 [#allocation9]
        %456 = vst.msk [vmem:[%s455] sm:$0xff] %vm363, %v453
        %v457 = vmul.f32 %v453, 0.35355338
        %v458 = vsel %vm363, %v457, -inf
        %459 = vmax.xlane.f32.xlu0 %v458
        %v460 = vpop.xlane.xlu0 %459
        %v461 = vsub.f32 %v457, %v460
        %v462 = vmul.f32 %v461, 1.442695
        %v463 = vpow.pop %v462
        %v464 = vsel %vm363, %v463, 0.0
        %465 = vadd.xlane.f32.xlu0 %v464
        %v466 = vpop.xlane.xlu0 %465
        %v467 = vrcp.pop %v466
        %v468 = vmul.f32 %v463, %v467
        %469 = vrot.lane.b32.xlu0 %v357, 56
        %v470 = vpop.permute.xlu0 %469
        %v473 = vsel %vm363, %v468, 0
        %475 = vmatpush.msra.mxu0 0.0
        %476 = vmatpush.msra.mxu0 0.0
        %477 = vmatpush.msra.mxu0 0.0
        %478 = vmatpush.msra.mxu0 0.0
        %479 = vmatpush.msra.mxu0 0.0
        %480 = vmatpush.msra.mxu0 0.0
        %481 = vmatpush.msra.mxu0 0.0
        %482 = vmatpush.msra.mxu0 0.0
        %483 = vmatpush.msra.mxu0 0.0
        %484 = vmatpush.msra.mxu0 0.0
        %485 = vmatpush.msra.mxu0 0.0
        %486 = vmatpush.msra.mxu0 0.0
        %487 = vmatpush.msra.mxu0 0.0
        %488 = vmatpush.msra.mxu0 0.0
        %489 = vmatpush.msra.mxu0 0.0
        %490 = vmatpush.msra.mxu0 %v470
        %491 = vmatmul.f32.gmra.mxu0 %v473
        %v492 = vpop.f32.mrf.mxu0
        %v493 = vadd.f32 0.0, %v492
        %494 = vdwg.mxu0
        %495 = vrot.lane.b32.xlu0 %v357, 112
        %v496 = vpop.permute.xlu0 %495
        %497 = vrot.lane.b32.xlu0 %v357, 80
        %v498 = vpop.permute.xlu0 %497
        %v499 = vsel %vm363, %v496, 0
        %v501 = vsel %vm363, %v498, 0
        %503 = vmatpush.xpose.msra.mxu0 0.0
        %504 = vmatpush.xpose.msra.mxu0 0.0
        %505 = vmatpush.xpose.msra.mxu0 0.0
        %506 = vmatpush.xpose.msra.mxu0 0.0
        %507 = vmatpush.xpose.msra.mxu0 0.0
        %508 = vmatpush.xpose.msra.mxu0 0.0
        %509 = vmatpush.xpose.msra.mxu0 0.0
        %510 = vmatpush.xpose.msra.mxu0 0.0
        %511 = vmatpush.xpose.msra.mxu0 0.0
        %512 = vmatpush.xpose.msra.mxu0 0.0
        %513 = vmatpush.xpose.msra.mxu0 0.0
        %514 = vmatpush.xpose.msra.mxu0 0.0
        %515 = vmatpush.xpose.msra.mxu0 0.0
        %516 = vmatpush.xpose.msra.mxu0 0.0
        %517 = vmatpush.xpose.msra.mxu0 0.0
        %518 = vmatpush.xpose.msra.mxu0 %v501
        %519 = vmatmul.f32.gmra.mxu0 %v499
        %v520 = vpop.f32.mrf.mxu0
        %v521 = vadd.f32 %v359, %v520
        %522 = vdwg.mxu0
        %s523 = scalar_lea.vmem %s321, 16 [#allocation9]
        %524 = vst.msk [vmem:[%s523] sm:$0xff] %vm363, %v521
        %v525 = vmul.f32 %v521, 0.35355338
        %v526 = vsel %vm363, %v525, -inf
        %527 = vmax.xlane.f32.xlu0 %v526
        %v528 = vpop.xlane.xlu0 %527
        %v529 = vsub.f32 %v525, %v528
        %v530 = vmul.f32 %v529, 1.442695
        %v531 = vpow.pop %v530
        %v532 = vsel %vm363, %v531, 0.0
        %533 = vadd.xlane.f32.xlu0 %v532
        %v534 = vpop.xlane.xlu0 %533
        %v535 = vrcp.pop %v534
        %v536 = vmul.f32 %v531, %v535
        %537 = vrot.lane.b32.xlu0 %v357, 48
        %v538 = vpop.permute.xlu0 %537
        %v541 = vsel %vm363, %v536, 0
        %543 = vmatpush.msra.mxu0 0.0
        %544 = vmatpush.msra.mxu0 0.0
        %545 = vmatpush.msra.mxu0 0.0
        %546 = vmatpush.msra.mxu0 0.0
        %547 = vmatpush.msra.mxu0 0.0
        %548 = vmatpush.msra.mxu0 0.0
        %549 = vmatpush.msra.mxu0 0.0
        %550 = vmatpush.msra.mxu0 0.0
        %551 = vmatpush.msra.mxu0 0.0
        %552 = vmatpush.msra.mxu0 0.0
        %553 = vmatpush.msra.mxu0 0.0
        %554 = vmatpush.msra.mxu0 0.0
        %555 = vmatpush.msra.mxu0 0.0
        %556 = vmatpush.msra.mxu0 0.0
        %557 = vmatpush.msra.mxu0 0.0
        %558 = vmatpush.msra.mxu0 %v538
        %559 = vmatmul.f32.gmra.mxu0 %v541
        %v560 = vpop.f32.mrf.mxu0
        %v561 = vadd.f32 0.0, %v560
        %562 = vdwg.mxu0
        %563 = vrot.lane.b32.xlu0 %v357, 104
        %v564 = vpop.permute.xlu0 %563
        %565 = vrot.lane.b32.xlu0 %v357, 72
        %v566 = vpop.permute.xlu0 %565
        %v567 = vsel %vm363, %v564, 0
        %v569 = vsel %vm363, %v566, 0
        %571 = vmatpush.xpose.msra.mxu0 0.0
        %572 = vmatpush.xpose.msra.mxu0 0.0
        %573 = vmatpush.xpose.msra.mxu0 0.0
        %574 = vmatpush.xpose.msra.mxu0 0.0
        %575 = vmatpush.xpose.msra.mxu0 0.0
        %576 = vmatpush.xpose.msra.mxu0 0.0
        %577 = vmatpush.xpose.msra.mxu0 0.0
        %578 = vmatpush.xpose.msra.mxu0 0.0
        %579 = vmatpush.xpose.msra.mxu0 0.0
        %580 = vmatpush.xpose.msra.mxu0 0.0
        %581 = vmatpush.xpose.msra.mxu0 0.0
        %582 = vmatpush.xpose.msra.mxu0 0.0
        %583 = vmatpush.xpose.msra.mxu0 0.0
        %584 = vmatpush.xpose.msra.mxu0 0.0
        %585 = vmatpush.xpose.msra.mxu0 0.0
        %586 = vmatpush.xpose.msra.mxu0 %v569
        %587 = vmatmul.f32.gmra.mxu0 %v567
        %v588 = vpop.f32.mrf.mxu0
        %v589 = vadd.f32 %v359, %v588
        %590 = vdwg.mxu0
        %s591 = scalar_lea.vmem %s321, 24 [#allocation9]
        %592 = vst.msk [vmem:[%s591] sm:$0xff] %vm363, %v589
        %v593 = vmul.f32 %v589, 0.35355338
        %v594 = vsel %vm363, %v593, -inf
        %595 = vmax.xlane.f32.xlu0 %v594
        %v596 = vpop.xlane.xlu0 %595
        %v597 = vsub.f32 %v593, %v596
        %v598 = vmul.f32 %v597, 1.442695
        %v599 = vpow.pop %v598
        %v600 = vsel %vm363, %v599, 0.0
        %601 = vadd.xlane.f32.xlu0 %v600
        %v602 = vpop.xlane.xlu0 %601
        %v603 = vrcp.pop %v602
        %v604 = vmul.f32 %v599, %v603
        %605 = vrot.lane.b32.xlu0 %v357, 40
        %v606 = vpop.permute.xlu0 %605
        %v609 = vsel %vm363, %v604, 0
        %611 = vmatpush.msra.mxu0 0.0
        %612 = vmatpush.msra.mxu0 0.0
        %613 = vmatpush.msra.mxu0 0.0
        %614 = vmatpush.msra.mxu0 0.0
        %615 = vmatpush.msra.mxu0 0.0
        %616 = vmatpush.msra.mxu0 0.0
        %617 = vmatpush.msra.mxu0 0.0
        %618 = vmatpush.msra.mxu0 0.0
        %619 = vmatpush.msra.mxu0 0.0
        %620 = vmatpush.msra.mxu0 0.0
        %621 = vmatpush.msra.mxu0 0.0
        %622 = vmatpush.msra.mxu0 0.0
        %623 = vmatpush.msra.mxu0 0.0
        %624 = vmatpush.msra.mxu0 0.0
        %625 = vmatpush.msra.mxu0 0.0
        %626 = vmatpush.msra.mxu0 %v606
        %627 = vmatmul.f32.gmra.mxu0 %v609
        %v628 = vpop.f32.mrf.mxu0
        %v629 = vadd.f32 0.0, %v628
        %630 = vdwg.mxu0
        %632 = vrot.lane.b32.xlu0 %v493, 8
        %v633 = vpop.permute.xlu0 %632
        %636 = vrot.lane.b32.xlu0 %v561, 16
        %v637 = vpop.permute.xlu0 %636
        %640 = vrot.lane.b32.xlu0 %v629, 24
        %v641 = vpop.permute.xlu0 %640
        %v643 = vsel %vm363, %v425, %v633
        %vm644 = vcmask 130048
        %v645 = vsel %vm644, %v643, %v637
        %vm646 = vcmask 195584
        %v647 = vsel %vm646, %v645, %v641
        %648 = vst.msk [vmem:[%s314] sm:$0xff] %vm335, %v647
        %s649 = sand.u32 %s143, 1
        %s650 = scalar_lea.sflag [#allocation4], %s649
        %s651 = sand.u32 %s143, 1
        %s652 = smul.addr %s651, 8
        %s653 = scalar_lea.vmem [#allocation8], %s652
        %s654 = sand.u32 %s171, 1
        %s655 = scalar_lea.sflag [#allocation10], %s654
        %s656 = sand.u32 %s171, 1
        %s657 = smul.addr %s656, 32
        %s658 = scalar_lea.vmem [#allocation9], %s657
        // Predicated region
        $region49: #{tpu_custom_call.1} parent=35 // pred_check
          %p659 = pneg %p153
        $region50: #{tpu_custom_call.1} parent=35 // pred_check_branch
          %661 = sbr.rel (%p659) target = $region52
        $region51: #{tpu_custom_call.1} parent=35 // pred_region
          %663 = vsyncadd %s650, 0
          %s664 = sadd.s32 %s32, %s31
          %s665 = smul.addr %s664, 8
          %s666 = scalar_lea.hbm %s4, %s665
          %s668 = sshll.u32 %s653, 4
          %s669 = int_to_ptr.vmem [resolvable:$true] %s668
          %s670 = sshll.u32 %s666, 4
          %s671 = int_to_ptr.hbm [resolvable:$true] %s670
          %673 = dma.vmem_to_hbm [thread:$0]  %s669, 128, %s671, %s650
        $region52: #{tpu_custom_call.1} parent=35 // pred_fallthru
          _
        // Predicated region
        $region53: #{tpu_custom_call.1} parent=35 // pred_check
          %p674 = pneg %p181
        $region54: #{tpu_custom_call.1} parent=35 // pred_check_branch
          %676 = sbr.rel (%p674) target = $region56
        $region55: #{tpu_custom_call.1} parent=35 // pred_region
          %s677 = smul.u32 4, %s32
          %679 = vsyncadd %s655, 0
          %s680 = smul.addr %s31, 4
          %s681 = sadd.s32 %s677, %s680
          %s682 = smul.addr %s681, 8
          %s683 = scalar_lea.hbm %s5, %s682
          %s684 = sshll.u32 %s658, 4
          %s685 = int_to_ptr.vmem [resolvable:$true] %s684
          %s686 = sshll.u32 %s683, 4
          %s687 = int_to_ptr.hbm [resolvable:$true] %s686
          %692 = dma.vmem_to_hbm [thread:$0]  %s685, 512, %s687, %s655, 128, 128, 8
        $region56: #{tpu_custom_call.1} parent=35 // pred_fallthru
          _
      $region36: #{tpu_custom_call.1} parent=5 // pred_fallthru
        _
      %p693 = scmp.le.s32.totalorder 2, %s22
      // Predicated region
      $region57: #{tpu_custom_call.1} parent=5 // pred_check
        %p694 = pneg %p693
      $region58: #{tpu_custom_call.1} parent=5 // pred_check_branch
        %696 = sbr.rel (%p694) target = $region60
      $region59: #{tpu_custom_call.1} parent=5 // pred_region
        %s697 = ssub.s32 %s22, 2
        // Predicated region
        $region61: #{tpu_custom_call.1} parent=59 // pred_check
          %p698 = pneg %p159
        $region62: #{tpu_custom_call.1} parent=59 // pred_check_branch
          %700 = sbr.rel (%p698) target = $region64
        $region63: #{tpu_custom_call.1} parent=59 // pred_region
          %s701 = sand.u32 %s144, 1
          %s702 = scalar_lea.sflag [#allocation4], %s701
          %s703 = sand.u32 %s144, 1
          %s704 = smul.addr %s703, 8
          %s705 = scalar_lea.vmem [#allocation8], %s704
          %707 = dma.done %s702, 128
        $region64: #{tpu_custom_call.1} parent=59 // pred_fallthru
          _
        // Predicated region
        $region65: #{tpu_custom_call.1} parent=59 // pred_check
          %p708 = pneg %p187
        $region66: #{tpu_custom_call.1} parent=59 // pred_check_branch
          %710 = sbr.rel (%p708) target = $region68
        $region67: #{tpu_custom_call.1} parent=59 // pred_region
          %s711 = sand.u32 %s172, 1
          %s712 = scalar_lea.sflag [#allocation10], %s711
          %s713 = sand.u32 %s172, 1
          %s714 = smul.addr %s713, 32
          %s715 = scalar_lea.vmem [#allocation9], %s714
          %717 = dma.done %s712, 512
        $region68: #{tpu_custom_call.1} parent=59 // pred_fallthru
          _
      $region60: #{tpu_custom_call.1} parent=5 // pred_fallthru
        _
    $region6: #{tpu_custom_call.1} parent=1 // loop_footer
      %s26 = sadd.s32 1, %s22
    $region7: #{tpu_custom_call.1} parent=1 // loop_footer_branch
      %21 = sbr.rel target = $region3
    $region8: #{tpu_custom_call.1} parent=1 // loop_exit
      _
    %718 = vsyncpa [#allocation3], 1
    %s719 = scalar_lea.sflag [#allocation3], 1
    %720 = vsyncpa %s719, 1
    %721 = vsyncpa [#allocation6], 1
    %722 = vsyncpa [#allocation4], 1
    %s723 = scalar_lea.sflag [#allocation4], 1
    %724 = vsyncpa %s723, 1
    %725 = vsyncpa [#allocation10], 1
    %s726 = scalar_lea.sflag [#allocation10], 1
    %727 = vsyncpa %s726, 1

</llo_original>
